<compile_context>
chip_gen: v7x
topology: tpu7x:2x2x1
jax: 0.10.0
libtpu: 0.0.40
codegen_flags: <defaults>
</compile_context>

<pallas_src>
import functools

import jax
import jax.numpy as jnp
from jax import lax
from jax.experimental import pallas as pl
from jax.experimental.pallas import tpu as pltpu

_HIGHEST = jax.lax.Precision.HIGHEST


def _contact_head_kernel(w_ref, wcol_ref, b_ref, mcol_ref, mrow_ref, x_ref,
                         o_ref, acc_ref, a_ref, *, cb):
    """Grid = (B, C // cb), channel axis innermost ("arbitrary").

    Per (batch, channel-block) step:
      * stream the unmasked channel slab(s), build partial = sum_j w_j * x_j
        and fold it into the resident (T,T) accumulator with ONE RMW,
      * per channel, compute masked row/col sums of the symmetrized slab with
        two small MXU matmuls (validity row as LHS) and store the (1,T) a1_c
        vector into the (C,T) scratch.
    On the last channel block (per batch): apply the validity mask once to
    acc + acc.T, rebuild s_c = w_c / a12_c from the stored a1 rows, apply the
    APC correction with ONE (C,T)x(C,T)->(T,T) MXU matmul (contraction over
    the channel dim, no materialized transpose), add bias, sigmoid, store."""
    cblk = pl.program_id(1)
    nblk = pl.num_programs(1)

    mrow = mrow_ref[...].astype(jnp.float32)            # (1, T) validity row

    partial = None
    for j in range(cb):                                 # small static unroll
        c = cblk * cb + j
        w = w_ref[c]                                    # SMEM scalar weight
        x = x_ref[j].astype(jnp.float32)                # (T, T), UNMASKED
        # Block-level weighted accumulation; the acc RMW is hoisted below.
        partial = w * x if partial is None else partial + w * x
        # Masked row / column sums on the (otherwise idle) MXU with the
        # validity row as LHS -- no per-element mask multiplies needed:
        #   rs[0, i] = sum_j v[j] * x[i, j]   (contract last dims)
        #   cs[0, j] = sum_i v[i] * x[i, j]   (plain matmul)
        rs = lax.dot_general(mrow, x, (((1,), (1,)), ((), ())),
                             preferred_element_type=jnp.float32,
                             precision=_HIGHEST)
        cs = lax.dot_general(mrow, x, (((1,), (0,)), ((), ())),
                             preferred_element_type=jnp.float32,
                             precision=_HIGHEST)
        # a1 of the masked, symmetrized channel slab as a lane-major row.
        a_ref[pl.ds(c, 1), :] = (rs + cs) * mrow

    # Exactly one accumulator read-modify-write per grid step.
    @pl.when(cblk == 0)
    def _():
        acc_ref[...] = partial

    @pl.when(cblk != 0)
    def _():
        acc_ref[...] += partial

    @pl.when(cblk == nblk - 1)
    def _():
        mcol = mcol_ref[...].astype(jnp.float32)        # (T, 1) validity col
        acc = acc_ref[...]
        # Symmetrize once; apply the (symmetric) validity mask ONCE.
        sym = (acc + acc.T) * mcol * mrow
        a1 = a_ref[...]                                  # (C, T)
        a12 = jnp.sum(a1, axis=1, keepdims=True)         # (C, 1)
        # Guard: a fully-masked / all-zero channel would give NaN in the
        # reference; we emit a zero correction instead (documented deviation).
        s = jnp.where(a12 != 0.0, wcol_ref[...] / a12, 0.0)   # (C, 1)
        # corr[i, j] = sum_c (w_c / a12_c) * a1_c[i] * a1_c[j]; contract over
        # the channel dim of both operands (no materialized transpose).
        corr = lax.dot_general(a1, a1 * s, (((0,), (0,)), ((), ())),
                               preferred_element_type=jnp.float32,
                               precision=_HIGHEST)
        logits = sym - corr + b_ref[0]
        o_ref[...] = jax.nn.sigmoid(logits).astype(o_ref.dtype)


def _vmem_budget_bytes():
    """~7/8 of the local generation's physical VMEM (v5e/v6e: ~112 MiB,
    v7x: ~56 MiB); conservative 56 MiB fallback if the query fails."""
    try:
        cap = int(pltpu.get_tpu_info().vmem_capacity_bytes)
    except Exception:
        cap = 64 * 1024 * 1024
    return int((cap * 7) // 8)


def _resident_bytes(cb, C, T, x_itemsize):
    return (2 * cb * T * T * x_itemsize    # double-buffered input slab(s)
            + 2 * T * T * 4                # double-buffered output block
            + T * T * 4                    # acc scratch
            + 2 * T * T * 4                # compiler temps (partial / sym / corr)
            + C * T * 4                    # a1 rows scratch
            + 4 * T * 4                    # mask blocks (double-buffered)
            + C * 4)                       # weight column


def _pick_channel_block(C, T, x_itemsize, requested, budget):
    """Largest divisor of C that is <= requested and fits the VMEM budget."""
    requested = max(1, int(requested))
    best = 1
    for d in range(1, C + 1):
        if C % d or d > requested:
            continue
        if _resident_bytes(d, C, T, x_itemsize) <= budget:
            best = d
    return best


def contact_head_pallas(x, weight, bias, mask_col, mask_row, *, channel_block=4):
    """x: [B, C, T, T] (f32 or bf16); weight: [C] f32; bias: [1] f32;
    mask_col: [B, T, 1] f32; mask_row: [B, 1, T] f32.
    Returns [B, T, T] f32 contact probabilities (full width; trim outside)."""
    B, C, T, _ = x.shape
    budget = _vmem_budget_bytes()
    cb = _pick_channel_block(C, T, jnp.dtype(x.dtype).itemsize,
                             channel_block, budget)

    kernel = functools.partial(_contact_head_kernel, cb=cb)
    return pl.pallas_call(
        kernel,
        out_shape=jax.ShapeDtypeStruct((B, T, T), jnp.float32),
        grid_spec=pltpu.PrefetchScalarGridSpec(
            num_scalar_prefetch=0,
            grid=(B, C // cb),
            in_specs=[
                pl.BlockSpec(memory_space=pltpu.MemorySpace.SMEM),    # weight [C]
                pl.BlockSpec((C, 1), lambda b, c: (0, 0)),            # weight col
                pl.BlockSpec(memory_space=pltpu.MemorySpace.SMEM),    # bias   [1]
                pl.BlockSpec((None, T, 1), lambda b, c: (b, 0, 0)),   # mask col
                pl.BlockSpec((None, 1, T), lambda b, c: (b, 0, 0)),   # mask row
                pl.BlockSpec((None, cb, T, T), lambda b, c: (b, c, 0, 0)),
            ],
            out_specs=pl.BlockSpec((None, T, T), lambda b, c: (b, 0, 0)),
            scratch_shapes=[
                pltpu.VMEM((T, T), jnp.float32),   # acc = sum_c w_c * x_c (unmasked)
                pltpu.VMEM((C, T), jnp.float32),   # a1_c rows of the masked sym
            ],
        ),
        compiler_params=pltpu.CompilerParams(
            dimension_semantics=("parallel", "arbitrary"),
            vmem_limit_bytes=budget),
        # TODO(synk): v7x, B==1 -> split the channel axis across the two
        # TensorCores (core-parallel leading grid axis, per-core partial acc /
        # a1 halves, tiny combine epilogue) for ~2x single-sequence throughput.
        # TODO(synk): v7x, T >~ 1280 -> tile the channel slab over rows
        # ((cb, tr, T) x-blocks, (tr, T) acc block) and move symmetrize + APC +
        # sigmoid into a cheap epilogue so the full-T^2 accumulator is never
        # resident.
    )(weight, weight.reshape(C, 1), bias, mask_col, mask_row, x)


def contact_prediction_head(tokens, attentions, weight, bias, *,
                            prepend_bos=True, append_eos=True, eos_idx=2,
                            channel_block=4, stream_dtype=None):
    """tokens: [B, T] int; attentions: [B, L, H, T, T]; weight: [1, L*H];
    bias: [1].  Returns [B, S, S] with S = T - prepend_bos - append_eos."""
    B, L, H, T, _ = attentions.shape
    x = attentions.reshape(B, L * H, T, T)           # free, no HBM copy
    if stream_dtype is not None and x.dtype != stream_dtype:
        # Halves streamed HBM bytes at realistic sizes; ideally the attention
        # producer emits this dtype directly (the cast here is one extra pass).
        x = x.astype(stream_dtype)

    # Tiny [B, T] validity mask: non-eos (if append_eos) AND inside the
    # bos/eos-trimmed window.  Applied inside the kernel.
    valid = jnp.ones((B, T), jnp.float32)
    pos = jnp.arange(T)
    if append_eos:
        valid = valid * (tokens != eos_idx).astype(jnp.float32)
        valid = valid * (pos < (T - 1)).astype(jnp.float32)[None, :]
    if prepend_bos:
        valid = valid * (pos >= 1).astype(jnp.float32)[None, :]
    mask_col = valid[:, :, None]                     # [B, T, 1]
    mask_row = valid[:, None, :]                     # [B, 1, T]

    out_full = contact_head_pallas(
        x,
        weight.reshape(-1).astype(jnp.float32),
        bias.reshape(-1).astype(jnp.float32),
        mask_col, mask_row, channel_block=channel_block)

    r0 = 1 if prepend_bos else 0
    r1 = T - (1 if append_eos else 0)
    # TODO(synk): for production, have the attention producer pad T to a
    # multiple of 128 (padded positions zeroed by `valid`) for lane-dense
    # loads/stores; do NOT pad here (that re-copies B*C*T^2 through HBM).
    return out_full[:, r0:r1, r0:r1]                 # small output-sized slice


def reference_forward(tokens, attentions, weight, bias, *,
                      prepend_bos=True, append_eos=True, eos_idx=2):
    """Pure-JAX reference reproducing the PyTorch module exactly."""
    if append_eos:
        eos_mask = (tokens != eos_idx).astype(attentions.dtype)
        pair = eos_mask[:, :, None] * eos_mask[:, None, :]
        attentions = attentions * pair[:, None, None, :, :]
        attentions = attentions[..., :-1, :-1]
    if prepend_bos:
        attentions = attentions[..., 1:, 1:]
    B, L, H, S, _ = attentions.shape
    x = attentions.reshape(B, L * H, S, S).astype(jnp.float32)
    sym = x + jnp.swapaxes(x, -1, -2)
    a1 = sym.sum(-1, keepdims=True)
    a2 = sym.sum(-2, keepdims=True)
    a12 = sym.sum((-1, -2), keepdims=True)
    normalized = sym - a1 * a2 / a12
    feat = jnp.transpose(normalized, (0, 2, 3, 1))            # [B, S, S, C]
    logits = feat @ weight.reshape(-1).astype(jnp.float32) \
        + bias.reshape(()).astype(jnp.float32)
    return jax.nn.sigmoid(logits)


if __name__ == "__main__":
    key = jax.random.PRNGKey(0)
    B, L, H, T = 2, 2, 2, 10          # small shapes: C = L*H = 4, S = T - 2 = 8
    eos_idx = 2
    k_tok, k_att, k_w, k_b = jax.random.split(key, 4)

    tokens = jax.random.randint(k_tok, (B, T), 3, 20, dtype=jnp.int32)
    tokens = tokens.at[:, 0].set(0)           # bos
    tokens = tokens.at[:, -1].set(eos_idx)    # eos

    attentions = jax.random.uniform(k_att, (B, L, H, T, T), dtype=jnp.float32)

    in_features = L * H
    weight = 0.1 * jax.random.normal(k_w, (1, in_features), dtype=jnp.float32)
    bias = 0.1 * jax.random.normal(k_b, (1,), dtype=jnp.float32)

    ref = reference_forward(tokens, attentions, weight, bias,
                            prepend_bos=True, append_eos=True, eos_idx=eos_idx)

    # f32 streaming; several channel blockings (cb=4 exercises a single step).
    for cb in (1, 2, 4):
        out = contact_prediction_head(tokens, attentions, weight, bias,
                                      prepend_bos=True, append_eos=True,
                                      eos_idx=eos_idx, channel_block=cb)
        out = jax.block_until_ready(out)
        assert out.shape == (B, T - 2, T - 2), out.shape
        assert jnp.allclose(out, ref, atol=1e-5, rtol=1e-5), \
            (cb, float(jnp.max(jnp.abs(out - ref))))

    # bf16 streaming path (halves HBM bytes at realistic sizes); looser tol.
    out_bf16 = contact_prediction_head(tokens, attentions, weight, bias,
                                       prepend_bos=True, append_eos=True,
                                       eos_idx=eos_idx, channel_block=2,
                                       stream_dtype=jnp.bfloat16)
    out_bf16 = jax.block_until_ready(out_bf16)
    assert out_bf16.shape == (B, T - 2, T - 2), out_bf16.shape
    assert jnp.allclose(out_bf16, ref, atol=2e-2, rtol=2e-2), \
        float(jnp.max(jnp.abs(out_bf16 - ref)))

    print("KERNEL_OK")
</pallas_src>

<mosaic_0001>
module attributes {stable_mosaic.version = 11 : i64} {
  func.func @_contact_head_kernel(%arg0: i32, %arg1: i32, %arg2: memref<4xf32, #tpu.memory_space<smem>>, %arg3: memref<4x1xf32, #tpu.memory_space<vmem>>, %arg4: memref<1xf32, #tpu.memory_space<smem>>, %arg5: memref<1x10x1xf32, #tpu.memory_space<vmem>>, %arg6: memref<1x1x10xf32, #tpu.memory_space<vmem>>, %arg7: memref<1x1x10x10xf32, #tpu.memory_space<vmem>>, %arg8: memref<1x10x10xf32, #tpu.memory_space<vmem>>, %arg9: memref<10x10xf32, #tpu.memory_space<vmem>>, %arg10: memref<4x10xf32, #tpu.memory_space<vmem>>) attributes {dimension_semantics = [#tpu.dimension_semantics<parallel>, #tpu.dimension_semantics<arbitrary>], iteration_bounds = array<i64: 2, 4>, scalar_prefetch = 0 : i64, scratch_operands = 2 : i64, tpu.core_type = #tpu.core_type<tc>, window_params = [{transform_indices = @transform_0, window_bounds = array<i64: 4>}, {pipeline_mode = #tpu.pipeline_mode<synchronous>, transform_indices = @transform_1, window_bounds = array<i64: 4, 1>}, {transform_indices = @transform_2, window_bounds = array<i64: 1>}, {transform_indices = @transform_3, window_bounds = array<i64: 1, 10, 1>}, {transform_indices = @transform_4, window_bounds = array<i64: 1, 1, 10>}, {transform_indices = @transform_5, window_bounds = array<i64: 1, 1, 10, 10>}, {transform_indices = @transform_6, window_bounds = array<i64: 1, 10, 10>}]} {
    %c0 = arith.constant 0 : index
    %c0_0 = arith.constant 0 : index
    %c0_1 = arith.constant 0 : index
    %0 = vector.load %arg6[%c0, %c0_0, %c0_1] : memref<1x1x10xf32, #tpu.memory_space<vmem>>, vector<1x1x10xf32>
    %1 = vector.shape_cast %0 : vector<1x1x10xf32> to vector<1x10xf32>
    %c1_i32 = arith.constant 1 : i32
    %2 = arith.muli %arg1, %c1_i32 : i32
    %c0_i32 = arith.constant 0 : i32
    %3 = arith.addi %2, %c0_i32 : i32
    %4 = arith.index_cast %3 : i32 to index
    %5 = memref.load %arg2[%4] : memref<4xf32, #tpu.memory_space<smem>>
    %c0_2 = arith.constant 0 : index
    %c0_3 = arith.constant 0 : index
    %c0_4 = arith.constant 0 : index
    %c0_5 = arith.constant 0 : index
    %6 = vector.load %arg7[%c0_2, %c0_3, %c0_4, %c0_5] : memref<1x1x10x10xf32, #tpu.memory_space<vmem>>, vector<1x1x10x10xf32>
    %7 = vector.shape_cast %6 : vector<1x1x10x10xf32> to vector<10x10xf32>
    %8 = vector.broadcast %5 : f32 to vector<10x10xf32>
    %9 = arith.mulf %8, %7 : vector<10x10xf32>
    %cst = arith.constant dense<0.000000e+00> : vector<1x10xf32>
    %10 = tpu.matmul %1, %7, %cst {dimension_numbers = #tpu.dot_dimension_numbers<[1], [1], [0], [0], [0, 0, 1, 0], [], []>, precision = #tpu.contract_precision<fp32>} : vector<1x10xf32>, vector<10x10xf32>, vector<1x10xf32> -> vector<1x10xf32>
    %cst_6 = arith.constant dense<0.000000e+00> : vector<1x10xf32>
    %11 = tpu.matmul %1, %7, %cst_6 {dimension_numbers = #tpu.dot_dimension_numbers<[1], [0], [0], [1], [0, 0, 1, 1], [], []>, precision = #tpu.contract_precision<fp32>} : vector<1x10xf32>, vector<10x10xf32>, vector<1x10xf32> -> vector<1x10xf32>
    %12 = arith.addf %10, %11 : vector<1x10xf32>
    %13 = arith.mulf %12, %1 : vector<1x10xf32>
    %14 = arith.index_cast %3 : i32 to index
    %c0_7 = arith.constant 0 : index
    %15 = vector.load %arg10[%14, %c0_7] : memref<4x10xf32, #tpu.memory_space<vmem>>, vector<1x10xf32>
    tpu.vector_store %arg10[%14, %c0_7], %13 {strides = array<i32>} : memref<4x10xf32, #tpu.memory_space<vmem>>, vector<1x10xf32>,
    %c0_i32_8 = arith.constant 0 : i32
    %16 = arith.cmpi eq, %arg1, %c0_i32_8 : i32
    %17 = arith.extui %16 : i1 to i32
    %c0_i32_9 = arith.constant 0 : i32
    %18 = arith.cmpi ne, %17, %c0_i32_9 : i32
    scf.if %18 {
      %c0_13 = arith.constant 0 : index
      %c0_14 = arith.constant 0 : index
      %25 = vector.load %arg9[%c0_13, %c0_14] : memref<10x10xf32, #tpu.memory_space<vmem>>, vector<10x10xf32>
      tpu.vector_store %arg9[%c0_13, %c0_14], %9 {strides = array<i32>} : memref<10x10xf32, #tpu.memory_space<vmem>>, vector<10x10xf32>,
    } else {
    }
    %c0_i32_10 = arith.constant 0 : i32
    %19 = arith.cmpi ne, %arg1, %c0_i32_10 : i32
    %20 = arith.extui %19 : i1 to i32
    %c0_i32_11 = arith.constant 0 : i32
    %21 = arith.cmpi ne, %20, %c0_i32_11 : i32
    scf.if %21 {
      %c0_13 = arith.constant 0 : index
      %c0_14 = arith.constant 0 : index
      %25 = vector.load %arg9[%c0_13, %c0_14] : memref<10x10xf32, #tpu.memory_space<vmem>>, vector<10x10xf32>
      %26 = arith.addf %25, %9 : vector<10x10xf32>
      %c0_15 = arith.constant 0 : index
      %c0_16 = arith.constant 0 : index
      %27 = vector.load %arg9[%c0_15, %c0_16] : memref<10x10xf32, #tpu.memory_space<vmem>>, vector<10x10xf32>
      tpu.vector_store %arg9[%c0_15, %c0_16], %26 {strides = array<i32>} : memref<10x10xf32, #tpu.memory_space<vmem>>, vector<10x10xf32>,
    } else {
    }
    %c3_i32 = arith.constant 3 : i32
    %22 = arith.cmpi eq, %arg1, %c3_i32 : i32
    %23 = arith.extui %22 : i1 to i32
    %c0_i32_12 = arith.constant 0 : i32
    %24 = arith.cmpi ne, %23, %c0_i32_12 : i32
    scf.if %24 {
      %c0_13 = arith.constant 0 : index
      %c0_14 = arith.constant 0 : index
      %c0_15 = arith.constant 0 : index
      %25 = vector.load %arg5[%c0_13, %c0_14, %c0_15] : memref<1x10x1xf32, #tpu.memory_space<vmem>>, vector<1x10x1xf32>
      %26 = vector.shape_cast %25 : vector<1x10x1xf32> to vector<10x1xf32>
      %c0_16 = arith.constant 0 : index
      %c0_17 = arith.constant 0 : index
      %27 = vector.load %arg9[%c0_16, %c0_17] : memref<10x10xf32, #tpu.memory_space<vmem>>, vector<10x10xf32>
      %28 = tpu.transpose %27, [1, 0] : vector<10x10xf32> -> vector<10x10xf32>
      %29 = arith.addf %27, %28 : vector<10x10xf32>
      %30 = vector.broadcast %26 : vector<10x1xf32> to vector<10x10xf32>
      %31 = arith.mulf %29, %30 : vector<10x10xf32>
      %32 = vector.broadcast %1 : vector<1x10xf32> to vector<10x10xf32>
      %33 = arith.mulf %31, %32 : vector<10x10xf32>
      %c0_18 = arith.constant 0 : index
      %c0_19 = arith.constant 0 : index
      %34 = vector.load %arg10[%c0_18, %c0_19] : memref<4x10xf32, #tpu.memory_space<vmem>>, vector<4x10xf32>
      %cst_20 = arith.constant dense<0.000000e+00> : vector<4xf32>
      %35 = vector.multi_reduction <add>, %34, %cst_20 [1] : vector<4x10xf32> to vector<4xf32>
      %36 = vector.shape_cast %35 : vector<4xf32> to vector<4x1xf32>
      %cst_21 = arith.constant 0.000000e+00 : f32
      %37 = vector.broadcast %cst_21 : f32 to vector<4x1xf32>
      %38 = arith.cmpf one, %36, %37 : vector<4x1xf32>
      %c0_22 = arith.constant 0 : index
      %c0_23 = arith.constant 0 : index
      %39 = vector.load %arg3[%c0_22, %c0_23] : memref<4x1xf32, #tpu.memory_space<vmem>>, vector<4x1xf32>
      %40 = arith.divf %39, %36 : vector<4x1xf32>
      %cst_24 = arith.constant 0.000000e+00 : f32
      %41 = vector.broadcast %cst_24 : f32 to vector<4x1xf32>
      %42 = arith.select %38, %40, %41 : vector<4x1xi1>, vector<4x1xf32>
      %43 = vector.broadcast %42 : vector<4x1xf32> to vector<4x10xf32>
      %44 = arith.mulf %34, %43 : vector<4x10xf32>
      %cst_25 = arith.constant dense<0.000000e+00> : vector<10x10xf32>
      %45 = tpu.matmul %34, %44, %cst_25 {dimension_numbers = #tpu.dot_dimension_numbers<[0], [0], [1], [1], [0, 1, 1, 1], [], []>, precision = #tpu.contract_precision<fp32>} : vector<4x10xf32>, vector<4x10xf32>, vector<10x10xf32> -> vector<10x10xf32>
      %46 = arith.subf %33, %45 : vector<10x10xf32>
      %c0_26 = arith.constant 0 : index
      %47 = memref.load %arg4[%c0_26] : memref<1xf32, #tpu.memory_space<smem>>
      %48 = vector.broadcast %47 : f32 to vector<10x10xf32>
      %49 = arith.addf %46, %48 : vector<10x10xf32>
      %50 = arith.negf %49 : vector<10x10xf32>
      %51 = math.exp %50 : vector<10x10xf32>
      %cst_27 = arith.constant 1.000000e+00 : f32
      %52 = vector.broadcast %cst_27 : f32 to vector<10x10xf32>
      %53 = arith.addf %52, %51 : vector<10x10xf32>
      %54 = arith.divf %52, %53 : vector<10x10xf32>
      %c0_28 = arith.constant 0 : index
      %c0_29 = arith.constant 0 : index
      %c0_30 = arith.constant 0 : index
      %55 = vector.load %arg8[%c0_28, %c0_29, %c0_30] : memref<1x10x10xf32, #tpu.memory_space<vmem>>, vector<1x10x10xf32>
      %56 = vector.shape_cast %55 : vector<1x10x10xf32> to vector<10x10xf32>
      %57 = vector.shape_cast %54 : vector<10x10xf32> to vector<1x10x10xf32>
      tpu.vector_store %arg8[%c0_28, %c0_29, %c0_30], %57 {strides = array<i32>} : memref<1x10x10xf32, #tpu.memory_space<vmem>>, vector<1x10x10xf32>,
    } else {
    }
    return
  }
  func.func @transform_0(%arg0: i32, %arg1: i32) -> i32 {
    %c0_i32 = arith.constant 0 : i32
    %c0_i32_0 = arith.constant 0 : i32
    return %c0_i32 : i32
  }
  func.func @transform_1(%arg0: i32, %arg1: i32) -> (i32, i32) {
    %c0_i32 = arith.constant 0 : i32
    %c0_i32_0 = arith.constant 0 : i32
    %c0_i32_1 = arith.constant 0 : i32
    return %c0_i32, %c0_i32_0 : i32, i32
  }
  func.func @transform_2(%arg0: i32, %arg1: i32) -> i32 {
    %c0_i32 = arith.constant 0 : i32
    %c0_i32_0 = arith.constant 0 : i32
    return %c0_i32 : i32
  }
  func.func @transform_3(%arg0: i32, %arg1: i32) -> (i32, i32, i32) {
    %c0_i32 = arith.constant 0 : i32
    %c0_i32_0 = arith.constant 0 : i32
    %c0_i32_1 = arith.constant 0 : i32
    return %arg0, %c0_i32, %c0_i32_0 : i32, i32, i32
  }
  func.func @transform_4(%arg0: i32, %arg1: i32) -> (i32, i32, i32) {
    %c0_i32 = arith.constant 0 : i32
    %c0_i32_0 = arith.constant 0 : i32
    %c0_i32_1 = arith.constant 0 : i32
    return %arg0, %c0_i32, %c0_i32_0 : i32, i32, i32
  }
  func.func @transform_5(%arg0: i32, %arg1: i32) -> (i32, i32, i32, i32) {
    %c0_i32 = arith.constant 0 : i32
    %c0_i32_0 = arith.constant 0 : i32
    %c0_i32_1 = arith.constant 0 : i32
    return %arg0, %arg1, %c0_i32, %c0_i32_0 : i32, i32, i32, i32
  }
  func.func @transform_6(%arg0: i32, %arg1: i32) -> (i32, i32, i32) {
    %c0_i32 = arith.constant 0 : i32
    %c0_i32_0 = arith.constant 0 : i32
    %c0_i32_1 = arith.constant 0 : i32
    return %arg0, %c0_i32, %c0_i32_0 : i32, i32, i32
  }
}

</mosaic_0001>

<llo_original>
// kernel: tpu_custom_call.1
$region0: #{tpu_custom_call.1}
  #allocation0 [shape = 'u32[]', space=smem, size = 0x4, offset = 0x4, fixed_abs, tag = 'smem constant byte address 0x4 - core index']
  #allocation1 [shape = 'u32[144,128]{1,0:T(1,128)}', space=vmem, size = 0x12000, scoped, tag = 'internal scratch']
  #allocation2 [shape = 'f32[10,10]{1,0:T(8,128)}', space=vmem, size = 0x2000, scoped, tag = 'scratch operand']
  #allocation3 [shape = 'f32[4,10]{1,0:T(4,128)}', space=vmem, size = 0x800, scoped, tag = 'scratch operand']
  #allocation4 [shape = 'f32[1]{0:T(128)S(6)}', space=smem, size = 0x200, scoped, tag = 'scoped memory for tpu_custom_call.1']
  %s0 = inlined_call_operand.vmem [shape: f32[4], index: 0, kind: input, shape index: {}]
  %s1 = inlined_call_operand.vmem [shape: f32[4,1], index: 1, kind: input, shape index: {}]
  %s2 = inlined_call_operand.<no memory space> [shape: f32[1], index: 2, kind: input, shape index: {}]
  %s3 = inlined_call_operand.vmem [shape: f32[2,10,1], index: 3, kind: input, shape index: {}]
  %s4 = inlined_call_operand.vmem [shape: f32[2,1,10], index: 4, kind: input, shape index: {}]
  %s5 = inlined_call_operand.vmem [shape: f32[2,4,10,10], index: 5, kind: input, shape index: {}]
  %s6 = inlined_call_operand.vmem [shape: f32[2,10,10], index: 6, kind: output, shape index: {}]
  %s7 = sld [smem:[#allocation0]]
  $region73: #{tpu_custom_call.1} parent=0
    _
  %s9 = ssub.s32 1, %s7
  %s10 = scalar_select 0, %s9, %s7
  %11 = sst [smem:[#allocation4]] %s2
  $region1: #{tpu_custom_call.1} parent=0
    #allocation5 [shape = 'u8[512]{0}', space=smem, size = 0x200, scoped, tag = 'input window, operand 0, single buffered']
    #allocation6 [shape = 's32[2]{0}', space=sflag, size = 0x8, scoped, tag = 'scoped memory for tpu_custom_call.1']
    %12 = vsyncpa [#allocation6], 0
    loop: start=0, step=1, limit=10
    $region2: #{tpu_custom_call.1} parent=1 // loop_pre_header
      _
    $region3: #{tpu_custom_call.1} parent=1 // loop_header
      %s14 = sphi 0, %s18
      %p15 = scmp.ge.s32.totalorder %s14, 10
      %s21 = sphi 0, %s33
      %s22 = sphi 0, %s29
      %s23 = sphi 0, %s21
      %s24 = sphi 0, %s22
      %s25 = sphi 0, %s23
      %s26 = sphi 0, %s24
      %s34 = sphi 0, %s34
      %s36 = sphi 0, %s34
      %s37 = sphi 0, %s36
      %s51 = sphi 0, %s37
      %s55 = sphi 0, %s55
      %s57 = sphi 0, %s55
      %s58 = sphi 0, %s57
      %s72 = sphi 0, %s58
      %s76 = sphi 0, %s76
      %s78 = sphi 0, %s76
      %s79 = sphi 0, %s78
      %s93 = sphi 0, %s79
      %s99 = sphi 0, %s101
      %s102 = sphi 0, %s99
      %s103 = sphi 0, %s102
      %s119 = sphi 0, %s103
      %s125 = sphi 0, %s127
      %s128 = sphi 0, %s125
      %s129 = sphi 0, %s128
      %s145 = sphi 0, %s129
      %s153 = sphi 0, %s155
      %s156 = sphi 0, %s153
      %s157 = sphi 0, %s156
      %s173 = sphi 0, %s157
      %s179 = sphi 0, %s181
      %s182 = sphi 0, %s179
      %s183 = sphi 0, %s182
      %s199 = sphi 0, %s183
    $region4: #{tpu_custom_call.1} parent=1 // loop_header_branch
      %17 = sbr.rel (%p15) target = $region8
    $region5: #{tpu_custom_call.1} parent=1 // loop_body
      %s19 = ssub.s32 %s14, 1
      %s20 = ssub.s32 %s14, 2
      %s27 = sadd.s32 1, %s22
      %p28 = scmp.ge.s32.totalorder %s27, 4
      %s29 = scalar_select %p28, 0, %s27
      %s30 = sadd.s32 1, %s21
      %s31 = scalar_select %p28, %s30, %s21
      %p32 = scmp.ge.s32.totalorder %s31, 2
      %s33 = scalar_select %p32, 0, %s31
      %s35 = sadd.s32 %s34, 1
      %p38 = scmp.eq.s32.totalorder %s14, 7
      %p39 = scmp.ne.s32.totalorder %s34, %s36
      %p40 = scmp.eq.s32.totalorder %s14, 0
      %p41 = por %p39, %p40
      %p42 = scmp.ne.s32.totalorder %s34, %s36
      %p43 = scmp.eq.s32.totalorder %s19, 7
      %p44 = por %p42, %p43
      %p45 = scmp.ne.s32.totalorder %s36, %s37
      %p46 = scmp.eq.s32.totalorder %s19, 0
      %p47 = por %p45, %p46
      %p48 = scmp.ne.s32.totalorder %s36, %s37
      %p49 = scmp.eq.s32.totalorder %s20, 7
      %p50 = por %p48, %p49
      %p52 = scmp.ne.s32.totalorder %s37, %s51
      %p53 = scmp.eq.s32.totalorder %s20, 0
      %p54 = por %p52, %p53
      %s56 = sadd.s32 %s55, 1
      %p59 = scmp.eq.s32.totalorder %s14, 7
      %p60 = scmp.ne.s32.totalorder %s55, %s57
      %p61 = scmp.eq.s32.totalorder %s14, 0
      %p62 = por %p60, %p61
      %p63 = scmp.ne.s32.totalorder %s55, %s57
      %p64 = scmp.eq.s32.totalorder %s19, 7
      %p65 = por %p63, %p64
      %p66 = scmp.ne.s32.totalorder %s57, %s58
      %p67 = scmp.eq.s32.totalorder %s19, 0
      %p68 = por %p66, %p67
      %p69 = scmp.ne.s32.totalorder %s57, %s58
      %p70 = scmp.eq.s32.totalorder %s20, 7
      %p71 = por %p69, %p70
      %p73 = scmp.ne.s32.totalorder %s58, %s72
      %p74 = scmp.eq.s32.totalorder %s20, 0
      %p75 = por %p73, %p74
      %s77 = sadd.s32 %s76, 1
      %p80 = scmp.eq.s32.totalorder %s14, 7
      %p81 = scmp.ne.s32.totalorder %s76, %s78
      %p82 = scmp.eq.s32.totalorder %s14, 0
      %p83 = por %p81, %p82
      %p84 = scmp.ne.s32.totalorder %s76, %s78
      %p85 = scmp.eq.s32.totalorder %s19, 7
      %p86 = por %p84, %p85
      %p87 = scmp.ne.s32.totalorder %s78, %s79
      %p88 = scmp.eq.s32.totalorder %s19, 0
      %p89 = por %p87, %p88
      %p90 = scmp.ne.s32.totalorder %s78, %s79
      %p91 = scmp.eq.s32.totalorder %s20, 7
      %p92 = por %p90, %p91
      %p94 = scmp.ne.s32.totalorder %s79, %s93
      %p95 = scmp.eq.s32.totalorder %s20, 0
      %p96 = por %p94, %p95
      %s97 = ssub.s32 %s21, %s33
      %p98 = scmp.eq.s32.totalorder %s97, 0
      %s100 = sadd.s32 %s99, 1
      %s101 = scalar_select %p98, %s99, %s100
      %p104 = pneg %p98
      %p105 = scmp.eq.s32.totalorder %s14, 7
      %p106 = por %p104, %p105
      %p107 = scmp.ne.s32.totalorder %s99, %s102
      %p108 = scmp.eq.s32.totalorder %s14, 0
      %p109 = por %p107, %p108
      %p110 = scmp.ne.s32.totalorder %s99, %s102
      %p111 = scmp.eq.s32.totalorder %s19, 7
      %p112 = por %p110, %p111
      %p113 = scmp.ne.s32.totalorder %s102, %s103
      %p114 = scmp.eq.s32.totalorder %s19, 0
      %p115 = por %p113, %p114
      %p116 = scmp.ne.s32.totalorder %s102, %s103
      %p117 = scmp.eq.s32.totalorder %s20, 7
      %p118 = por %p116, %p117
      %p120 = scmp.ne.s32.totalorder %s103, %s119
      %p121 = scmp.eq.s32.totalorder %s20, 0
      %p122 = por %p120, %p121
      %s123 = ssub.s32 %s21, %s33
      %p124 = scmp.eq.s32.totalorder %s123, 0
      %s126 = sadd.s32 %s125, 1
      %s127 = scalar_select %p124, %s125, %s126
      %p130 = pneg %p124
      %p131 = scmp.eq.s32.totalorder %s14, 7
      %p132 = por %p130, %p131
      %p133 = scmp.ne.s32.totalorder %s125, %s128
      %p134 = scmp.eq.s32.totalorder %s14, 0
      %p135 = por %p133, %p134
      %p136 = scmp.ne.s32.totalorder %s125, %s128
      %p137 = scmp.eq.s32.totalorder %s19, 7
      %p138 = por %p136, %p137
      %p139 = scmp.ne.s32.totalorder %s128, %s129
      %p140 = scmp.eq.s32.totalorder %s19, 0
      %p141 = por %p139, %p140
      %p142 = scmp.ne.s32.totalorder %s128, %s129
      %p143 = scmp.eq.s32.totalorder %s20, 7
      %p144 = por %p142, %p143
      %p146 = scmp.ne.s32.totalorder %s129, %s145
      %p147 = scmp.eq.s32.totalorder %s20, 0
      %p148 = por %p146, %p147
      %s149 = ssub.s32 %s21, %s33
      %s150 = ssub.s32 %s22, %s29
      %s151 = sor.u32 %s149, %s150
      %p152 = scmp.eq.s32.totalorder %s151, 0
      %s154 = sadd.s32 %s153, 1
      %s155 = scalar_select %p152, %s153, %s154
      %p158 = pneg %p152
      %p159 = scmp.eq.s32.totalorder %s14, 7
      %p160 = por %p158, %p159
      %p161 = scmp.ne.s32.totalorder %s153, %s156
      %p162 = scmp.eq.s32.totalorder %s14, 0
      %p163 = por %p161, %p162
      %p164 = scmp.ne.s32.totalorder %s153, %s156
      %p165 = scmp.eq.s32.totalorder %s19, 7
      %p166 = por %p164, %p165
      %p167 = scmp.ne.s32.totalorder %s156, %s157
      %p168 = scmp.eq.s32.totalorder %s19, 0
      %p169 = por %p167, %p168
      %p170 = scmp.ne.s32.totalorder %s156, %s157
      %p171 = scmp.eq.s32.totalorder %s20, 7
      %p172 = por %p170, %p171
      %p174 = scmp.ne.s32.totalorder %s157, %s173
      %p175 = scmp.eq.s32.totalorder %s20, 0
      %p176 = por %p174, %p175
      %s177 = ssub.s32 %s21, %s33
      %p178 = scmp.eq.s32.totalorder %s177, 0
      %s180 = sadd.s32 %s179, 1
      %s181 = scalar_select %p178, %s179, %s180
      %p184 = pneg %p178
      %p185 = scmp.eq.s32.totalorder %s14, 7
      %p186 = por %p184, %p185
      %p187 = scmp.ne.s32.totalorder %s179, %s182
      %p188 = scmp.eq.s32.totalorder %s14, 0
      %p189 = por %p187, %p188
      %p190 = scmp.ne.s32.totalorder %s179, %s182
      %p191 = scmp.eq.s32.totalorder %s19, 7
      %p192 = por %p190, %p191
      %p193 = scmp.ne.s32.totalorder %s182, %s183
      %p194 = scmp.eq.s32.totalorder %s19, 0
      %p195 = por %p193, %p194
      %p196 = scmp.ne.s32.totalorder %s182, %s183
      %p197 = scmp.eq.s32.totalorder %s20, 7
      %p198 = por %p196, %p197
      %p200 = scmp.ne.s32.totalorder %s183, %s199
      %p201 = scmp.eq.s32.totalorder %s20, 0
      %p202 = por %p200, %p201
      %p203 = scmp.le.s32.totalorder 1, %s14
      %p204 = scmp.lt.s32.totalorder %s14, 9
      %p205 = pnand %p203, %p204
      %p206 = pneg %p205
      // Predicated region
      $region9: #{tpu_custom_call.1} parent=5 // pred_check
        _
      $region10: #{tpu_custom_call.1} parent=5 // pred_check_branch
        %208 = sbr.rel (%p205) target = $region12
      $region11: #{tpu_custom_call.1} parent=5 // pred_region
        %s209 = ssub.s32 %s14, 1
        // Predicated region
        $region13: #{tpu_custom_call.1} parent=11 // pred_check
          %p210 = pneg %p47
        $region14: #{tpu_custom_call.1} parent=11 // pred_check_branch
          %212 = sbr.rel (%p210) target = $region16
        $region15: #{tpu_custom_call.1} parent=11 // pred_region
          %s214 = ssub.s32 16, 16
          %215 = vsyncadd [#allocation6], %s214
          %s217 = sshll.u32 %s0, 4
          %s218 = int_to_ptr.vmem [resolvable:$true] %s217
          %220 = dma.vmem_to_smem %s218, 16, [#allocation5], [#allocation6]
        $region16: #{tpu_custom_call.1} parent=11 // pred_fallthru
          _
        // Predicated region
        $region17: #{tpu_custom_call.1} parent=11 // pred_check
          %p221 = pneg %p68
        $region18: #{tpu_custom_call.1} parent=11 // pred_check_branch
          %223 = sbr.rel (%p221) target = $region20
        $region19: #{tpu_custom_call.1} parent=11 // pred_region
          _
        $region20: #{tpu_custom_call.1} parent=11 // pred_fallthru
          _
        // Predicated region
        $region21: #{tpu_custom_call.1} parent=11 // pred_check
          %p224 = pneg %p89
        $region22: #{tpu_custom_call.1} parent=11 // pred_check_branch
          %226 = sbr.rel (%p224) target = $region24
        $region23: #{tpu_custom_call.1} parent=11 // pred_region
          _
        $region24: #{tpu_custom_call.1} parent=11 // pred_fallthru
          _
      $region12: #{tpu_custom_call.1} parent=5 // pred_fallthru
        _
      %p227 = scmp.lt.s32.totalorder %s14, 8
      // Predicated region
      $region25: #{tpu_custom_call.1} parent=5 // pred_check
        %p228 = pneg %p227
      $region26: #{tpu_custom_call.1} parent=5 // pred_check_branch
        %230 = sbr.rel (%p228) target = $region28
      $region27: #{tpu_custom_call.1} parent=5 // pred_region
        // Predicated region
        $region29: #{tpu_custom_call.1} parent=27 // pred_check
          %p231 = pneg %p109
        $region30: #{tpu_custom_call.1} parent=27 // pred_check_branch
          %233 = sbr.rel (%p231) target = $region32
        $region31: #{tpu_custom_call.1} parent=27 // pred_region
          %p234 = scmp.lt.s32.totalorder %s21, 1
          %s235 = scalar_select %p234, %s21, 1
          %s236 = smul.addr %s235, 2
          %s237 = smul.addr %s236, 8
          %s238 = scalar_lea.vmem %s3, %s237
        $region32: #{tpu_custom_call.1} parent=27 // pred_fallthru
          _
        // Predicated region
        $region33: #{tpu_custom_call.1} parent=27 // pred_check
          %p239 = pneg %p135
        $region34: #{tpu_custom_call.1} parent=27 // pred_check_branch
          %241 = sbr.rel (%p239) target = $region36
        $region35: #{tpu_custom_call.1} parent=27 // pred_region
          %p242 = scmp.lt.s32.totalorder %s21, 1
          %s243 = scalar_select %p242, %s21, 1
          %s244 = scalar_lea.vmem %s4, %s243
        $region36: #{tpu_custom_call.1} parent=27 // pred_fallthru
          _
        // Predicated region
        $region37: #{tpu_custom_call.1} parent=27 // pred_check
          %p245 = pneg %p163
        $region38: #{tpu_custom_call.1} parent=27 // pred_check_branch
          %247 = sbr.rel (%p245) target = $region40
        $region39: #{tpu_custom_call.1} parent=27 // pred_region
          %p248 = scmp.lt.s32.totalorder %s21, 1
          %s249 = scalar_select %p248, %s21, 1
          %p250 = scmp.lt.s32.totalorder %s22, 3
          %s251 = scalar_select %p250, %s22, 3
          %s252 = smul.addr %s251, 2
          %s253 = smul.addr %s249, 8
          %s254 = sadd.s32 %s252, %s253
          %s255 = smul.addr %s254, 8
          %s256 = scalar_lea.vmem %s5, %s255
        $region40: #{tpu_custom_call.1} parent=27 // pred_fallthru
          _
      $region28: #{tpu_custom_call.1} parent=5 // pred_fallthru
        _
      %p257 = scmp.le.s32.totalorder 1, %s14
      %p258 = scmp.lt.s32.totalorder %s14, 9
      %p259 = pnand %p257, %p258
      %p260 = pneg %p259
      // Predicated region
      $region41: #{tpu_custom_call.1} parent=5 // pred_check
        _
      $region42: #{tpu_custom_call.1} parent=5 // pred_check_branch
        %262 = sbr.rel (%p259) target = $region44
      $region43: #{tpu_custom_call.1} parent=5 // pred_region
        %s263 = ssub.s32 %s14, 1
        // Predicated region
        $region45: #{tpu_custom_call.1} parent=43 // pred_check
          %p264 = pneg %p47
        $region46: #{tpu_custom_call.1} parent=43 // pred_check_branch
          %266 = sbr.rel (%p264) target = $region48
        $region47: #{tpu_custom_call.1} parent=43 // pred_region
          %267 = dma.done [#allocation6], 16
        $region48: #{tpu_custom_call.1} parent=43 // pred_fallthru
          _
        %268 = sfence
        %p269 = pneg %p47
        %p270 = pneg %p44
        %p271 = pneg %p68
        %p272 = pneg %p65
        %p273 = pneg %p89
        %p274 = pneg %p86
        %p275 = scmp.lt.s32.totalorder %s23, 1
        %s276 = scalar_select %p275, %s23, 1
        %s277 = smul.addr %s276, 2
        %s278 = smul.addr %s277, 8
        %s279 = scalar_lea.vmem %s3, %s278
        %p280 = pneg %p115
        %p281 = pneg %p112
        %p282 = scmp.lt.s32.totalorder %s23, 1
        %s283 = scalar_select %p282, %s23, 1
        %s284 = scalar_lea.vmem %s4, %s283
        %p285 = pneg %p141
        %p286 = pneg %p138
        %p287 = scmp.lt.s32.totalorder %s23, 1
        %s288 = scalar_select %p287, %s23, 1
        %p289 = scmp.lt.s32.totalorder %s24, 3
        %s290 = scalar_select %p289, %s24, 3
        %s291 = smul.addr %s290, 2
        %s292 = smul.addr %s288, 8
        %s293 = sadd.s32 %s291, %s292
        %s294 = smul.addr %s293, 8
        %s295 = scalar_lea.vmem %s5, %s294
        %p296 = pneg %p169
        %p297 = pneg %p166
        %p298 = pneg %p195
        %p299 = pneg %p192
        %p300 = scmp.lt.s32.totalorder %s23, 1
        %s301 = scalar_select %p300, %s23, 1
        %s302 = smul.addr %s301, 2
        %s303 = smul.addr %s302, 8
        %s304 = scalar_lea.vmem %s6, %s303
        %p305 = scmp.lt.s32.totalorder %s23, 1
        %s306 = scalar_select %p305, %s23, 1
        %s307 = smul.addr %s306, 2
        %s308 = smul.addr %s307, 8
        %s309 = scalar_lea.vmem %s3, %s308
        %p310 = scmp.lt.s32.totalorder %s23, 1
        %s311 = scalar_select %p310, %s23, 1
        %s312 = scalar_lea.vmem %s4, %s311
        %p313 = scmp.lt.s32.totalorder %s23, 1
        %s314 = scalar_select %p313, %s23, 1
        %p315 = scmp.lt.s32.totalorder %s24, 3
        %s316 = scalar_select %p315, %s24, 3
        %s317 = smul.addr %s316, 2
        %s318 = smul.addr %s314, 8
        %s319 = sadd.s32 %s317, %s318
        %s320 = smul.addr %s319, 8
        %s321 = scalar_lea.vmem %s5, %s320
        %p322 = scmp.lt.s32.totalorder %s23, 1
        %s323 = scalar_select %p322, %s23, 1
        %s324 = smul.addr %s323, 2
        %s325 = smul.addr %s324, 8
        %s326 = scalar_lea.vmem %s6, %s325
        %v327 = vld [vmem:[%s312] sm:$0x1]
        %s328 = sld [smem:[#allocation5 + %s24]]
        %v329 = vld [vmem:[%s321] sm:$0xff]
        %v330 = vld [vmem:[%s321 + $0x8] sm:$0x3]
        %v331 = vstv %s328
        %v332 = vmul.f32 %v331, %v329
        %v333 = vmul.f32 %v331, %v330
        %vm334 = vcmask 80896
        %v336 = vsel %vm334, %v327, 0
        %vm338 = vcmask 1041408
        %v340 = vsel %vm338, %v330, 0
        %342 = vmatprep.subr.mxu0 0.0
        %v343 = vand.u32 %v329, 4294901760
        %344 = vmatpush1.msra.mxu0 %v343
        %345 = vmatprep.subr.mxu0 0.0
        %v346 = vand.u32 %v340, 4294901760
        %347 = vmatpush1.msra.mxu0 %v346
        %348 = vmatprep.subr.mxu0 0.0
        %349 = vmatpush1.msra.mxu0 0.0
        %350 = vmatprep.subr.mxu0 0.0
        %351 = vmatpush1.msra.mxu0 0.0
        %352 = vmatprep.subr.mxu0 0.0
        %353 = vmatpush1.msra.mxu0 0.0
        %354 = vmatprep.subr.mxu0 0.0
        %355 = vmatpush1.msra.mxu0 0.0
        %356 = vmatprep.subr.mxu0 0.0
        %357 = vmatpush1.msra.mxu0 0.0
        %358 = vmatprep.subr.mxu0 0.0
        %359 = vmatpush1.msra.mxu0 0.0
        %360 = vmatprep.subr.mxu0 0.0
        %361 = vmatpush1.msra.mxu0 0.0
        %362 = vmatprep.subr.mxu0 0.0
        %363 = vmatpush1.msra.mxu0 0.0
        %364 = vmatprep.subr.mxu0 0.0
        %365 = vmatpush1.msra.mxu0 0.0
        %366 = vmatprep.subr.mxu0 0.0
        %367 = vmatpush1.msra.mxu0 0.0
        %368 = vmatprep.subr.mxu0 0.0
        %369 = vmatpush1.msra.mxu0 0.0
        %370 = vmatprep.subr.mxu0 0.0
        %371 = vmatpush1.msra.mxu0 0.0
        %372 = vmatprep.subr.mxu0 0.0
        %373 = vmatpush1.msra.mxu0 0.0
        %374 = vmatprep.subr.mxu0 0.0
        %375 = vmatpush1.msra.mxu0 0.0
        %376 = vmatprep.subr.mxu0 0.0
        %377 = vmatpush1.msra.mxu0 0.0
        %378 = vmatprep.subr.mxu0 0.0
        %379 = vmatpush1.msra.mxu0 0.0
        %380 = vmatprep.subr.mxu0 0.0
        %381 = vmatpush1.msra.mxu0 0.0
        %382 = vmatprep.subr.mxu0 0.0
        %383 = vmatpush1.msra.mxu0 0.0
        %384 = vmatprep.subr.mxu0 0.0
        %385 = vmatpush1.msra.mxu0 0.0
        %386 = vmatprep.subr.mxu0 0.0
        %387 = vmatpush1.msra.mxu0 0.0
        %388 = vmatprep.subr.mxu0 0.0
        %389 = vmatpush1.msra.mxu0 0.0
        %390 = vmatprep.subr.mxu0 0.0
        %391 = vmatpush1.msra.mxu0 0.0
        %392 = vmatprep.subr.mxu0 0.0
        %393 = vmatpush1.msra.mxu0 0.0
        %394 = vmatprep.subr.mxu0 0.0
        %395 = vmatpush1.msra.mxu0 0.0
        %396 = vmatprep.subr.mxu0 0.0
        %397 = vmatpush1.msra.mxu0 0.0
        %398 = vmatprep.subr.mxu0 0.0
        %399 = vmatpush1.msra.mxu0 0.0
        %400 = vmatprep.subr.mxu0 0.0
        %401 = vmatpush1.msra.mxu0 0.0
        %402 = vmatprep.subr.mxu0 0.0
        %403 = vmatpush1.msra.mxu0 0.0
        %404 = vmatprep.subr.mxu0 0.0
        %405 = vmatpush1.msra.mxu0 0.0
        %406 = vmatprep.subr.mxu0 0.0
        %407 = vmatpush1.msra.mxu0 0.0
        %408 = vmatprep.mubr.f32.mxu0 0.0
        %v409 = vand.u32 %v336, 4294901760
        %v410 = vsub.f32 %v336, %v409
        %v411 = vand.u32 %v410, 4294901760
        %v412 = vsub.f32 %v410, %v411
        %v413 = vand.u32 %v412, 4294901760
        %414 = vmatmul.mubr.f32.gmra.mrb[0].mxu0 %v413
        %v415 = vpop.f32.mrb[0].mxu0
        %v416 = vadd.f32 0.0, %v415
        %v417 = vpop.f32.mrb[0].mxu0
        %418 = vdwg.mxu0
        %419 = vmatprep.subr.mxu0 0.0
        %v420 = vand.u32 %v329, 4294901760
        %v421 = vsub.f32 %v329, %v420
        %v422 = vand.u32 %v421, 4294901760
        %v423 = vsub.f32 %v421, %v422
        %v424 = vand.u32 %v423, 4294901760
        %425 = vmatpush1.msra.mxu0 %v424
        %426 = vmatprep.subr.mxu0 0.0
        %v427 = vand.u32 %v340, 4294901760
        %v428 = vsub.f32 %v340, %v427
        %v429 = vand.u32 %v428, 4294901760
        %v430 = vsub.f32 %v428, %v429
        %v431 = vand.u32 %v430, 4294901760
        %432 = vmatpush1.msra.mxu0 %v431
        %433 = vmatprep.subr.mxu0 0.0
        %434 = vmatpush1.msra.mxu0 0.0
        %435 = vmatprep.subr.mxu0 0.0
        %436 = vmatpush1.msra.mxu0 0.0
        %437 = vmatprep.subr.mxu0 0.0
        %438 = vmatpush1.msra.mxu0 0.0
        %439 = vmatprep.subr.mxu0 0.0
        %440 = vmatpush1.msra.mxu0 0.0
        %441 = vmatprep.subr.mxu0 0.0
        %442 = vmatpush1.msra.mxu0 0.0
        %443 = vmatprep.subr.mxu0 0.0
        %444 = vmatpush1.msra.mxu0 0.0
        %445 = vmatprep.subr.mxu0 0.0
        %446 = vmatpush1.msra.mxu0 0.0
        %447 = vmatprep.subr.mxu0 0.0
        %448 = vmatpush1.msra.mxu0 0.0
        %449 = vmatprep.subr.mxu0 0.0
        %450 = vmatpush1.msra.mxu0 0.0
        %451 = vmatprep.subr.mxu0 0.0
        %452 = vmatpush1.msra.mxu0 0.0
        %453 = vmatprep.subr.mxu0 0.0
        %454 = vmatpush1.msra.mxu0 0.0
        %455 = vmatprep.subr.mxu0 0.0
        %456 = vmatpush1.msra.mxu0 0.0
        %457 = vmatprep.subr.mxu0 0.0
        %458 = vmatpush1.msra.mxu0 0.0
        %459 = vmatprep.subr.mxu0 0.0
        %460 = vmatpush1.msra.mxu0 0.0
        %461 = vmatprep.subr.mxu0 0.0
        %462 = vmatpush1.msra.mxu0 0.0
        %463 = vmatprep.subr.mxu0 0.0
        %464 = vmatpush1.msra.mxu0 0.0
        %465 = vmatprep.subr.mxu0 0.0
        %466 = vmatpush1.msra.mxu0 0.0
        %467 = vmatprep.subr.mxu0 0.0
        %468 = vmatpush1.msra.mxu0 0.0
        %469 = vmatprep.subr.mxu0 0.0
        %470 = vmatpush1.msra.mxu0 0.0
        %471 = vmatprep.subr.mxu0 0.0
        %472 = vmatpush1.msra.mxu0 0.0
        %473 = vmatprep.subr.mxu0 0.0
        %474 = vmatpush1.msra.mxu0 0.0
        %475 = vmatprep.subr.mxu0 0.0
        %476 = vmatpush1.msra.mxu0 0.0
        %477 = vmatprep.subr.mxu0 0.0
        %478 = vmatpush1.msra.mxu0 0.0
        %479 = vmatprep.subr.mxu0 0.0
        %480 = vmatpush1.msra.mxu0 0.0
        %481 = vmatprep.subr.mxu0 0.0
        %482 = vmatpush1.msra.mxu0 0.0
        %483 = vmatprep.subr.mxu0 0.0
        %484 = vmatpush1.msra.mxu0 0.0
        %485 = vmatprep.subr.mxu0 0.0
        %486 = vmatpush1.msra.mxu0 0.0
        %487 = vmatprep.subr.mxu0 0.0
        %488 = vmatpush1.msra.mxu0 0.0
        %489 = vmatprep.subr.mxu0 0.0
        %490 = vmatpush1.msra.mxu0 0.0
        %491 = vmatprep.subr.mxu0 0.0
        %492 = vmatpush1.msra.mxu0 0.0
        %493 = vmatprep.mubr.f32.mxu0 0.0
        %v494 = vand.u32 %v336, 4294901760
        %495 = vmatmul.mubr.f32.gmra.mrb[0].mxu0 %v494
        %v496 = vpop.f32.mrb[0].mxu0
        %v497 = vadd.f32 %v416, %v496
        %v498 = vpop.f32.mrb[0].mxu0
        %499 = vdwg.mxu0
        %500 = vmatprep.subr.mxu0 0.0
        %v501 = vand.u32 %v329, 4294901760
        %v502 = vsub.f32 %v329, %v501
        %503 = vmatpush1.msra.mxu0 %v502
        %504 = vmatprep.subr.mxu0 0.0
        %v505 = vand.u32 %v340, 4294901760
        %v506 = vsub.f32 %v340, %v505
        %507 = vmatpush1.msra.mxu0 %v506
        %508 = vmatprep.subr.mxu0 0.0
        %509 = vmatpush1.msra.mxu0 0.0
        %510 = vmatprep.subr.mxu0 0.0
        %511 = vmatpush1.msra.mxu0 0.0
        %512 = vmatprep.subr.mxu0 0.0
        %513 = vmatpush1.msra.mxu0 0.0
        %514 = vmatprep.subr.mxu0 0.0
        %515 = vmatpush1.msra.mxu0 0.0
        %516 = vmatprep.subr.mxu0 0.0
        %517 = vmatpush1.msra.mxu0 0.0
        %518 = vmatprep.subr.mxu0 0.0
        %519 = vmatpush1.msra.mxu0 0.0
        %520 = vmatprep.subr.mxu0 0.0
        %521 = vmatpush1.msra.mxu0 0.0
        %522 = vmatprep.subr.mxu0 0.0
        %523 = vmatpush1.msra.mxu0 0.0
        %524 = vmatprep.subr.mxu0 0.0
        %525 = vmatpush1.msra.mxu0 0.0
        %526 = vmatprep.subr.mxu0 0.0
        %527 = vmatpush1.msra.mxu0 0.0
        %528 = vmatprep.subr.mxu0 0.0
        %529 = vmatpush1.msra.mxu0 0.0
        %530 = vmatprep.subr.mxu0 0.0
        %531 = vmatpush1.msra.mxu0 0.0
        %532 = vmatprep.subr.mxu0 0.0
        %533 = vmatpush1.msra.mxu0 0.0
        %534 = vmatprep.subr.mxu0 0.0
        %535 = vmatpush1.msra.mxu0 0.0
        %536 = vmatprep.subr.mxu0 0.0
        %537 = vmatpush1.msra.mxu0 0.0
        %538 = vmatprep.subr.mxu0 0.0
        %539 = vmatpush1.msra.mxu0 0.0
        %540 = vmatprep.subr.mxu0 0.0
        %541 = vmatpush1.msra.mxu0 0.0
        %542 = vmatprep.subr.mxu0 0.0
        %543 = vmatpush1.msra.mxu0 0.0
        %544 = vmatprep.subr.mxu0 0.0
        %545 = vmatpush1.msra.mxu0 0.0
        %546 = vmatprep.subr.mxu0 0.0
        %547 = vmatpush1.msra.mxu0 0.0
        %548 = vmatprep.subr.mxu0 0.0
        %549 = vmatpush1.msra.mxu0 0.0
        %550 = vmatprep.subr.mxu0 0.0
        %551 = vmatpush1.msra.mxu0 0.0
        %552 = vmatprep.subr.mxu0 0.0
        %553 = vmatpush1.msra.mxu0 0.0
        %554 = vmatprep.subr.mxu0 0.0
        %555 = vmatpush1.msra.mxu0 0.0
        %556 = vmatprep.subr.mxu0 0.0
        %557 = vmatpush1.msra.mxu0 0.0
        %558 = vmatprep.subr.mxu0 0.0
        %559 = vmatpush1.msra.mxu0 0.0
        %560 = vmatprep.subr.mxu0 0.0
        %561 = vmatpush1.msra.mxu0 0.0
        %562 = vmatprep.subr.mxu0 0.0
        %563 = vmatpush1.msra.mxu0 0.0
        %564 = vmatprep.subr.mxu0 0.0
        %565 = vmatpush1.msra.mxu0 0.0
        %566 = vmatprep.subr.mxu0 0.0
        %567 = vmatpush1.msra.mxu0 0.0
        %568 = vmatprep.mubr.f32.mxu0 0.0
        %v569 = vand.u32 %v336, 4294901760
        %v570 = vsub.f32 %v336, %v569
        %571 = vmatmul.mubr.f32.gmra.mrb[0].mxu0 %v570
        %v572 = vpop.f32.mrb[0].mxu0
        %v573 = vadd.f32 %v497, %v572
        %v574 = vpop.f32.mrb[0].mxu0
        %575 = vdwg.mxu0
        %576 = vmatprep.subr.mxu0 0.0
        %v577 = vand.u32 %v329, 4294901760
        %578 = vmatpush1.msra.mxu0 %v577
        %579 = vmatprep.subr.mxu0 0.0
        %v580 = vand.u32 %v340, 4294901760
        %581 = vmatpush1.msra.mxu0 %v580
        %582 = vmatprep.subr.mxu0 0.0
        %583 = vmatpush1.msra.mxu0 0.0
        %584 = vmatprep.subr.mxu0 0.0
        %585 = vmatpush1.msra.mxu0 0.0
        %586 = vmatprep.subr.mxu0 0.0
        %587 = vmatpush1.msra.mxu0 0.0
        %588 = vmatprep.subr.mxu0 0.0
        %589 = vmatpush1.msra.mxu0 0.0
        %590 = vmatprep.subr.mxu0 0.0
        %591 = vmatpush1.msra.mxu0 0.0
        %592 = vmatprep.subr.mxu0 0.0
        %593 = vmatpush1.msra.mxu0 0.0
        %594 = vmatprep.subr.mxu0 0.0
        %595 = vmatpush1.msra.mxu0 0.0
        %596 = vmatprep.subr.mxu0 0.0
        %597 = vmatpush1.msra.mxu0 0.0
        %598 = vmatprep.subr.mxu0 0.0
        %599 = vmatpush1.msra.mxu0 0.0
        %600 = vmatprep.subr.mxu0 0.0
        %601 = vmatpush1.msra.mxu0 0.0
        %602 = vmatprep.subr.mxu0 0.0
        %603 = vmatpush1.msra.mxu0 0.0
        %604 = vmatprep.subr.mxu0 0.0
        %605 = vmatpush1.msra.mxu0 0.0
        %606 = vmatprep.subr.mxu0 0.0
        %607 = vmatpush1.msra.mxu0 0.0
        %608 = vmatprep.subr.mxu0 0.0
        %609 = vmatpush1.msra.mxu0 0.0
        %610 = vmatprep.subr.mxu0 0.0
        %611 = vmatpush1.msra.mxu0 0.0
        %612 = vmatprep.subr.mxu0 0.0
        %613 = vmatpush1.msra.mxu0 0.0
        %614 = vmatprep.subr.mxu0 0.0
        %615 = vmatpush1.msra.mxu0 0.0
        %616 = vmatprep.subr.mxu0 0.0
        %617 = vmatpush1.msra.mxu0 0.0
        %618 = vmatprep.subr.mxu0 0.0
        %619 = vmatpush1.msra.mxu0 0.0
        %620 = vmatprep.subr.mxu0 0.0
        %621 = vmatpush1.msra.mxu0 0.0
        %622 = vmatprep.subr.mxu0 0.0
        %623 = vmatpush1.msra.mxu0 0.0
        %624 = vmatprep.subr.mxu0 0.0
        %625 = vmatpush1.msra.mxu0 0.0
        %626 = vmatprep.subr.mxu0 0.0
        %627 = vmatpush1.msra.mxu0 0.0
        %628 = vmatprep.subr.mxu0 0.0
        %629 = vmatpush1.msra.mxu0 0.0
        %630 = vmatprep.subr.mxu0 0.0
        %631 = vmatpush1.msra.mxu0 0.0
        %632 = vmatprep.subr.mxu0 0.0
        %633 = vmatpush1.msra.mxu0 0.0
        %634 = vmatprep.subr.mxu0 0.0
        %635 = vmatpush1.msra.mxu0 0.0
        %636 = vmatprep.subr.mxu0 0.0
        %637 = vmatpush1.msra.mxu0 0.0
        %638 = vmatprep.subr.mxu0 0.0
        %639 = vmatpush1.msra.mxu0 0.0
        %640 = vmatprep.subr.mxu0 0.0
        %641 = vmatpush1.msra.mxu0 0.0
        %642 = vmatprep.mubr.f32.mxu0 0.0
        %v643 = vand.u32 %v336, 4294901760
        %v644 = vsub.f32 %v336, %v643
        %v645 = vand.u32 %v644, 4294901760
        %646 = vmatmul.mubr.f32.gmra.mrb[0].mxu0 %v645
        %v647 = vpop.f32.mrb[0].mxu0
        %v648 = vadd.f32 %v573, %v647
        %v649 = vpop.f32.mrb[0].mxu0
        %650 = vdwg.mxu0
        %651 = vmatprep.subr.mxu0 0.0
        %v652 = vand.u32 %v329, 4294901760
        %v653 = vsub.f32 %v329, %v652
        %v654 = vand.u32 %v653, 4294901760
        %655 = vmatpush1.msra.mxu0 %v654
        %656 = vmatprep.subr.mxu0 0.0
        %v657 = vand.u32 %v340, 4294901760
        %v658 = vsub.f32 %v340, %v657
        %v659 = vand.u32 %v658, 4294901760
        %660 = vmatpush1.msra.mxu0 %v659
        %661 = vmatprep.subr.mxu0 0.0
        %662 = vmatpush1.msra.mxu0 0.0
        %663 = vmatprep.subr.mxu0 0.0
        %664 = vmatpush1.msra.mxu0 0.0
        %665 = vmatprep.subr.mxu0 0.0
        %666 = vmatpush1.msra.mxu0 0.0
        %667 = vmatprep.subr.mxu0 0.0
        %668 = vmatpush1.msra.mxu0 0.0
        %669 = vmatprep.subr.mxu0 0.0
        %670 = vmatpush1.msra.mxu0 0.0
        %671 = vmatprep.subr.mxu0 0.0
        %672 = vmatpush1.msra.mxu0 0.0
        %673 = vmatprep.subr.mxu0 0.0
        %674 = vmatpush1.msra.mxu0 0.0
        %675 = vmatprep.subr.mxu0 0.0
        %676 = vmatpush1.msra.mxu0 0.0
        %677 = vmatprep.subr.mxu0 0.0
        %678 = vmatpush1.msra.mxu0 0.0
        %679 = vmatprep.subr.mxu0 0.0
        %680 = vmatpush1.msra.mxu0 0.0
        %681 = vmatprep.subr.mxu0 0.0
        %682 = vmatpush1.msra.mxu0 0.0
        %683 = vmatprep.subr.mxu0 0.0
        %684 = vmatpush1.msra.mxu0 0.0
        %685 = vmatprep.subr.mxu0 0.0
        %686 = vmatpush1.msra.mxu0 0.0
        %687 = vmatprep.subr.mxu0 0.0
        %688 = vmatpush1.msra.mxu0 0.0
        %689 = vmatprep.subr.mxu0 0.0
        %690 = vmatpush1.msra.mxu0 0.0
        %691 = vmatprep.subr.mxu0 0.0
        %692 = vmatpush1.msra.mxu0 0.0
        %693 = vmatprep.subr.mxu0 0.0
        %694 = vmatpush1.msra.mxu0 0.0
        %695 = vmatprep.subr.mxu0 0.0
        %696 = vmatpush1.msra.mxu0 0.0
        %697 = vmatprep.subr.mxu0 0.0
        %698 = vmatpush1.msra.mxu0 0.0
        %699 = vmatprep.subr.mxu0 0.0
        %700 = vmatpush1.msra.mxu0 0.0
        %701 = vmatprep.subr.mxu0 0.0
        %702 = vmatpush1.msra.mxu0 0.0
        %703 = vmatprep.subr.mxu0 0.0
        %704 = vmatpush1.msra.mxu0 0.0
        %705 = vmatprep.subr.mxu0 0.0
        %706 = vmatpush1.msra.mxu0 0.0
        %707 = vmatprep.subr.mxu0 0.0
        %708 = vmatpush1.msra.mxu0 0.0
        %709 = vmatprep.subr.mxu0 0.0
        %710 = vmatpush1.msra.mxu0 0.0
        %711 = vmatprep.subr.mxu0 0.0
        %712 = vmatpush1.msra.mxu0 0.0
        %713 = vmatprep.subr.mxu0 0.0
        %714 = vmatpush1.msra.mxu0 0.0
        %715 = vmatprep.subr.mxu0 0.0
        %716 = vmatpush1.msra.mxu0 0.0
        %717 = vmatprep.subr.mxu0 0.0
        %718 = vmatpush1.msra.mxu0 0.0
        %719 = vmatprep.subr.mxu0 0.0
        %720 = vmatpush1.msra.mxu0 0.0
        %721 = vmatprep.mubr.f32.mxu0 0.0
        %v722 = vand.u32 %v336, 4294901760
        %723 = vmatmul.mubr.f32.gmra.mrb[0].mxu0 %v722
        %v724 = vpop.f32.mrb[0].mxu0
        %v725 = vadd.f32 %v648, %v724
        %v726 = vpop.f32.mrb[0].mxu0
        %727 = vdwg.mxu0
        %728 = vmatprep.subr.mxu0 0.0
        %v729 = vand.u32 %v329, 4294901760
        %730 = vmatpush1.msra.mxu0 %v729
        %731 = vmatprep.subr.mxu0 0.0
        %v732 = vand.u32 %v340, 4294901760
        %733 = vmatpush1.msra.mxu0 %v732
        %734 = vmatprep.subr.mxu0 0.0
        %735 = vmatpush1.msra.mxu0 0.0
        %736 = vmatprep.subr.mxu0 0.0
        %737 = vmatpush1.msra.mxu0 0.0
        %738 = vmatprep.subr.mxu0 0.0
        %739 = vmatpush1.msra.mxu0 0.0
        %740 = vmatprep.subr.mxu0 0.0
        %741 = vmatpush1.msra.mxu0 0.0
        %742 = vmatprep.subr.mxu0 0.0
        %743 = vmatpush1.msra.mxu0 0.0
        %744 = vmatprep.subr.mxu0 0.0
        %745 = vmatpush1.msra.mxu0 0.0
        %746 = vmatprep.subr.mxu0 0.0
        %747 = vmatpush1.msra.mxu0 0.0
        %748 = vmatprep.subr.mxu0 0.0
        %749 = vmatpush1.msra.mxu0 0.0
        %750 = vmatprep.subr.mxu0 0.0
        %751 = vmatpush1.msra.mxu0 0.0
        %752 = vmatprep.subr.mxu0 0.0
        %753 = vmatpush1.msra.mxu0 0.0
        %754 = vmatprep.subr.mxu0 0.0
        %755 = vmatpush1.msra.mxu0 0.0
        %756 = vmatprep.subr.mxu0 0.0
        %757 = vmatpush1.msra.mxu0 0.0
        %758 = vmatprep.subr.mxu0 0.0
        %759 = vmatpush1.msra.mxu0 0.0
        %760 = vmatprep.subr.mxu0 0.0
        %761 = vmatpush1.msra.mxu0 0.0
        %762 = vmatprep.subr.mxu0 0.0
        %763 = vmatpush1.msra.mxu0 0.0
        %764 = vmatprep.subr.mxu0 0.0
        %765 = vmatpush1.msra.mxu0 0.0
        %766 = vmatprep.subr.mxu0 0.0
        %767 = vmatpush1.msra.mxu0 0.0
        %768 = vmatprep.subr.mxu0 0.0
        %769 = vmatpush1.msra.mxu0 0.0
        %770 = vmatprep.subr.mxu0 0.0
        %771 = vmatpush1.msra.mxu0 0.0
        %772 = vmatprep.subr.mxu0 0.0
        %773 = vmatpush1.msra.mxu0 0.0
        %774 = vmatprep.subr.mxu0 0.0
        %775 = vmatpush1.msra.mxu0 0.0
        %776 = vmatprep.subr.mxu0 0.0
        %777 = vmatpush1.msra.mxu0 0.0
        %778 = vmatprep.subr.mxu0 0.0
        %779 = vmatpush1.msra.mxu0 0.0
        %780 = vmatprep.subr.mxu0 0.0
        %781 = vmatpush1.msra.mxu0 0.0
        %782 = vmatprep.subr.mxu0 0.0
        %783 = vmatpush1.msra.mxu0 0.0
        %784 = vmatprep.subr.mxu0 0.0
        %785 = vmatpush1.msra.mxu0 0.0
        %786 = vmatprep.subr.mxu0 0.0
        %787 = vmatpush1.msra.mxu0 0.0
        %788 = vmatprep.subr.mxu0 0.0
        %789 = vmatpush1.msra.mxu0 0.0
        %790 = vmatprep.subr.mxu0 0.0
        %791 = vmatpush1.msra.mxu0 0.0
        %792 = vmatprep.subr.mxu0 0.0
        %793 = vmatpush1.msra.mxu0 0.0
        %794 = vmatprep.mubr.f32.mxu0 0.0
        %v795 = vand.u32 %v336, 4294901760
        %796 = vmatmul.mubr.f32.gmra.mrb[0].mxu0 %v795
        %v797 = vpop.f32.mrb[0].mxu0
        %v798 = vadd.f32 %v725, %v797
        %v799 = vpop.f32.mrb[0].mxu0
        %800 = vdwg.mxu0
        %v802 = vsel %vm334, %v329, 0
        %v804 = vsel %vm334, %v330, 0
        %806 = vmatprep.subr.mxu0 0.0
        %v807 = vand.u32 %v802, 4294901760
        %808 = vmatpush1.xpose.msra.mxu0 %v807
        %809 = vmatprep.subr.mxu0 0.0
        %v810 = vand.u32 %v804, 4294901760
        %811 = vmatpush1.xpose.msra.mxu0 %v810
        %812 = vmatprep.subr.mxu0 0.0
        %813 = vmatpush1.xpose.msra.mxu0 0.0
        %814 = vmatprep.subr.mxu0 0.0
        %815 = vmatpush1.xpose.msra.mxu0 0.0
        %816 = vmatprep.subr.mxu0 0.0
        %817 = vmatpush1.xpose.msra.mxu0 0.0
        %818 = vmatprep.subr.mxu0 0.0
        %819 = vmatpush1.xpose.msra.mxu0 0.0
        %820 = vmatprep.subr.mxu0 0.0
        %821 = vmatpush1.xpose.msra.mxu0 0.0
        %822 = vmatprep.subr.mxu0 0.0
        %823 = vmatpush1.xpose.msra.mxu0 0.0
        %824 = vmatprep.subr.mxu0 0.0
        %825 = vmatpush1.xpose.msra.mxu0 0.0
        %826 = vmatprep.subr.mxu0 0.0
        %827 = vmatpush1.xpose.msra.mxu0 0.0
        %828 = vmatprep.subr.mxu0 0.0
        %829 = vmatpush1.xpose.msra.mxu0 0.0
        %830 = vmatprep.subr.mxu0 0.0
        %831 = vmatpush1.xpose.msra.mxu0 0.0
        %832 = vmatprep.subr.mxu0 0.0
        %833 = vmatpush1.xpose.msra.mxu0 0.0
        %834 = vmatprep.subr.mxu0 0.0
        %835 = vmatpush1.xpose.msra.mxu0 0.0
        %836 = vmatprep.subr.mxu0 0.0
        %837 = vmatpush1.xpose.msra.mxu0 0.0
        %838 = vmatprep.subr.mxu0 0.0
        %839 = vmatpush1.xpose.msra.mxu0 0.0
        %840 = vmatprep.subr.mxu0 0.0
        %841 = vmatpush1.xpose.msra.mxu0 0.0
        %842 = vmatprep.subr.mxu0 0.0
        %843 = vmatpush1.xpose.msra.mxu0 0.0
        %844 = vmatprep.subr.mxu0 0.0
        %845 = vmatpush1.xpose.msra.mxu0 0.0
        %846 = vmatprep.subr.mxu0 0.0
        %847 = vmatpush1.xpose.msra.mxu0 0.0
        %848 = vmatprep.subr.mxu0 0.0
        %849 = vmatpush1.xpose.msra.mxu0 0.0
        %850 = vmatprep.subr.mxu0 0.0
        %851 = vmatpush1.xpose.msra.mxu0 0.0
        %852 = vmatprep.subr.mxu0 0.0
        %853 = vmatpush1.xpose.msra.mxu0 0.0
        %854 = vmatprep.subr.mxu0 0.0
        %855 = vmatpush1.xpose.msra.mxu0 0.0
        %856 = vmatprep.subr.mxu0 0.0
        %857 = vmatpush1.xpose.msra.mxu0 0.0
        %858 = vmatprep.subr.mxu0 0.0
        %859 = vmatpush1.xpose.msra.mxu0 0.0
        %860 = vmatprep.subr.mxu0 0.0
        %861 = vmatpush1.xpose.msra.mxu0 0.0
        %862 = vmatprep.subr.mxu0 0.0
        %863 = vmatpush1.xpose.msra.mxu0 0.0
        %864 = vmatprep.subr.mxu0 0.0
        %865 = vmatpush1.xpose.msra.mxu0 0.0
        %866 = vmatprep.subr.mxu0 0.0
        %867 = vmatpush1.xpose.msra.mxu0 0.0
        %868 = vmatprep.subr.mxu0 0.0
        %869 = vmatpush1.xpose.msra.mxu0 0.0
        %870 = vmatprep.subr.mxu0 0.0
        %871 = vmatpush1.xpose.msra.mxu0 0.0
        %872 = vmatprep.mubr.f32.mxu0 0.0
        %v873 = vand.u32 %v336, 4294901760
        %v874 = vsub.f32 %v336, %v873
        %v875 = vand.u32 %v874, 4294901760
        %v876 = vsub.f32 %v874, %v875
        %v877 = vand.u32 %v876, 4294901760
        %878 = vmatmul.mubr.f32.gmra.mrb[0].mxu0 %v877
        %v879 = vpop.f32.mrb[0].mxu0
        %v880 = vadd.f32 %v798, %v879
        %v881 = vpop.f32.mrb[0].mxu0
        %882 = vdwg.mxu0
        %883 = vmatprep.subr.mxu0 0.0
        %v884 = vand.u32 %v802, 4294901760
        %v885 = vsub.f32 %v802, %v884
        %v886 = vand.u32 %v885, 4294901760
        %v887 = vsub.f32 %v885, %v886
        %v888 = vand.u32 %v887, 4294901760
        %889 = vmatpush1.xpose.msra.mxu0 %v888
        %890 = vmatprep.subr.mxu0 0.0
        %v891 = vand.u32 %v804, 4294901760
        %v892 = vsub.f32 %v804, %v891
        %v893 = vand.u32 %v892, 4294901760
        %v894 = vsub.f32 %v892, %v893
        %v895 = vand.u32 %v894, 4294901760
        %896 = vmatpush1.xpose.msra.mxu0 %v895
        %897 = vmatprep.subr.mxu0 0.0
        %898 = vmatpush1.xpose.msra.mxu0 0.0
        %899 = vmatprep.subr.mxu0 0.0
        %900 = vmatpush1.xpose.msra.mxu0 0.0
        %901 = vmatprep.subr.mxu0 0.0
        %902 = vmatpush1.xpose.msra.mxu0 0.0
        %903 = vmatprep.subr.mxu0 0.0
        %904 = vmatpush1.xpose.msra.mxu0 0.0
        %905 = vmatprep.subr.mxu0 0.0
        %906 = vmatpush1.xpose.msra.mxu0 0.0
        %907 = vmatprep.subr.mxu0 0.0
        %908 = vmatpush1.xpose.msra.mxu0 0.0
        %909 = vmatprep.subr.mxu0 0.0
        %910 = vmatpush1.xpose.msra.mxu0 0.0
        %911 = vmatprep.subr.mxu0 0.0
        %912 = vmatpush1.xpose.msra.mxu0 0.0
        %913 = vmatprep.subr.mxu0 0.0
        %914 = vmatpush1.xpose.msra.mxu0 0.0
        %915 = vmatprep.subr.mxu0 0.0
        %916 = vmatpush1.xpose.msra.mxu0 0.0
        %917 = vmatprep.subr.mxu0 0.0
        %918 = vmatpush1.xpose.msra.mxu0 0.0
        %919 = vmatprep.subr.mxu0 0.0
        %920 = vmatpush1.xpose.msra.mxu0 0.0
        %921 = vmatprep.subr.mxu0 0.0
        %922 = vmatpush1.xpose.msra.mxu0 0.0
        %923 = vmatprep.subr.mxu0 0.0
        %924 = vmatpush1.xpose.msra.mxu0 0.0
        %925 = vmatprep.subr.mxu0 0.0
        %926 = vmatpush1.xpose.msra.mxu0 0.0
        %927 = vmatprep.subr.mxu0 0.0
        %928 = vmatpush1.xpose.msra.mxu0 0.0
        %929 = vmatprep.subr.mxu0 0.0
        %930 = vmatpush1.xpose.msra.mxu0 0.0
        %931 = vmatprep.subr.mxu0 0.0
        %932 = vmatpush1.xpose.msra.mxu0 0.0
        %933 = vmatprep.subr.mxu0 0.0
        %934 = vmatpush1.xpose.msra.mxu0 0.0
        %935 = vmatprep.subr.mxu0 0.0
        %936 = vmatpush1.xpose.msra.mxu0 0.0
        %937 = vmatprep.subr.mxu0 0.0
        %938 = vmatpush1.xpose.msra.mxu0 0.0
        %939 = vmatprep.subr.mxu0 0.0
        %940 = vmatpush1.xpose.msra.mxu0 0.0
        %941 = vmatprep.subr.mxu0 0.0
        %942 = vmatpush1.xpose.msra.mxu0 0.0
        %943 = vmatprep.subr.mxu0 0.0
        %944 = vmatpush1.xpose.msra.mxu0 0.0
        %945 = vmatprep.subr.mxu0 0.0
        %946 = vmatpush1.xpose.msra.mxu0 0.0
        %947 = vmatprep.subr.mxu0 0.0
        %948 = vmatpush1.xpose.msra.mxu0 0.0
        %949 = vmatprep.subr.mxu0 0.0
        %950 = vmatpush1.xpose.msra.mxu0 0.0
        %951 = vmatprep.subr.mxu0 0.0
        %952 = vmatpush1.xpose.msra.mxu0 0.0
        %953 = vmatprep.subr.mxu0 0.0
        %954 = vmatpush1.xpose.msra.mxu0 0.0
        %955 = vmatprep.subr.mxu0 0.0
        %956 = vmatpush1.xpose.msra.mxu0 0.0
        %957 = vmatprep.mubr.f32.mxu0 0.0
        %v958 = vand.u32 %v336, 4294901760
        %959 = vmatmul.mubr.f32.gmra.mrb[0].mxu0 %v958
        %v960 = vpop.f32.mrb[0].mxu0
        %v961 = vadd.f32 %v880, %v960
        %v962 = vpop.f32.mrb[0].mxu0
        %963 = vdwg.mxu0
        %964 = vmatprep.subr.mxu0 0.0
        %v965 = vand.u32 %v802, 4294901760
        %v966 = vsub.f32 %v802, %v965
        %967 = vmatpush1.xpose.msra.mxu0 %v966
        %968 = vmatprep.subr.mxu0 0.0
        %v969 = vand.u32 %v804, 4294901760
        %v970 = vsub.f32 %v804, %v969
        %971 = vmatpush1.xpose.msra.mxu0 %v970
        %972 = vmatprep.subr.mxu0 0.0
        %973 = vmatpush1.xpose.msra.mxu0 0.0
        %974 = vmatprep.subr.mxu0 0.0
        %975 = vmatpush1.xpose.msra.mxu0 0.0
        %976 = vmatprep.subr.mxu0 0.0
        %977 = vmatpush1.xpose.msra.mxu0 0.0
        %978 = vmatprep.subr.mxu0 0.0
        %979 = vmatpush1.xpose.msra.mxu0 0.0
        %980 = vmatprep.subr.mxu0 0.0
        %981 = vmatpush1.xpose.msra.mxu0 0.0
        %982 = vmatprep.subr.mxu0 0.0
        %983 = vmatpush1.xpose.msra.mxu0 0.0
        %984 = vmatprep.subr.mxu0 0.0
        %985 = vmatpush1.xpose.msra.mxu0 0.0
        %986 = vmatprep.subr.mxu0 0.0
        %987 = vmatpush1.xpose.msra.mxu0 0.0
        %988 = vmatprep.subr.mxu0 0.0
        %989 = vmatpush1.xpose.msra.mxu0 0.0
        %990 = vmatprep.subr.mxu0 0.0
        %991 = vmatpush1.xpose.msra.mxu0 0.0
        %992 = vmatprep.subr.mxu0 0.0
        %993 = vmatpush1.xpose.msra.mxu0 0.0
        %994 = vmatprep.subr.mxu0 0.0
        %995 = vmatpush1.xpose.msra.mxu0 0.0
        %996 = vmatprep.subr.mxu0 0.0
        %997 = vmatpush1.xpose.msra.mxu0 0.0
        %998 = vmatprep.subr.mxu0 0.0
        %999 = vmatpush1.xpose.msra.mxu0 0.0
        %1000 = vmatprep.subr.mxu0 0.0
        %1001 = vmatpush1.xpose.msra.mxu0 0.0
        %1002 = vmatprep.subr.mxu0 0.0
        %1003 = vmatpush1.xpose.msra.mxu0 0.0
        %1004 = vmatprep.subr.mxu0 0.0
        %1005 = vmatpush1.xpose.msra.mxu0 0.0
        %1006 = vmatprep.subr.mxu0 0.0
        %1007 = vmatpush1.xpose.msra.mxu0 0.0
        %1008 = vmatprep.subr.mxu0 0.0
        %1009 = vmatpush1.xpose.msra.mxu0 0.0
        %1010 = vmatprep.subr.mxu0 0.0
        %1011 = vmatpush1.xpose.msra.mxu0 0.0
        %1012 = vmatprep.subr.mxu0 0.0
        %1013 = vmatpush1.xpose.msra.mxu0 0.0
        %1014 = vmatprep.subr.mxu0 0.0
        %1015 = vmatpush1.xpose.msra.mxu0 0.0
        %1016 = vmatprep.subr.mxu0 0.0
        %1017 = vmatpush1.xpose.msra.mxu0 0.0
        %1018 = vmatprep.subr.mxu0 0.0
        %1019 = vmatpush1.xpose.msra.mxu0 0.0
        %1020 = vmatprep.subr.mxu0 0.0
        %1021 = vmatpush1.xpose.msra.mxu0 0.0
        %1022 = vmatprep.subr.mxu0 0.0
        %1023 = vmatpush1.xpose.msra.mxu0 0.0
        %1024 = vmatprep.subr.mxu0 0.0
        %1025 = vmatpush1.xpose.msra.mxu0 0.0
        %1026 = vmatprep.subr.mxu0 0.0
        %1027 = vmatpush1.xpose.msra.mxu0 0.0
        %1028 = vmatprep.subr.mxu0 0.0
        %1029 = vmatpush1.xpose.msra.mxu0 0.0
        %1030 = vmatprep.subr.mxu0 0.0
        %1031 = vmatpush1.xpose.msra.mxu0 0.0
        %1032 = vmatprep.mubr.f32.mxu0 0.0
        %v1033 = vand.u32 %v336, 4294901760
        %v1034 = vsub.f32 %v336, %v1033
        %1035 = vmatmul.mubr.f32.gmra.mrb[0].mxu0 %v1034
        %v1036 = vpop.f32.mrb[0].mxu0
        %v1037 = vadd.f32 %v961, %v1036
        %v1038 = vpop.f32.mrb[0].mxu0
        %1039 = vdwg.mxu0
        %1040 = vmatprep.subr.mxu0 0.0
        %v1041 = vand.u32 %v802, 4294901760
        %1042 = vmatpush1.xpose.msra.mxu0 %v1041
        %1043 = vmatprep.subr.mxu0 0.0
        %v1044 = vand.u32 %v804, 4294901760
        %1045 = vmatpush1.xpose.msra.mxu0 %v1044
        %1046 = vmatprep.subr.mxu0 0.0
        %1047 = vmatpush1.xpose.msra.mxu0 0.0
        %1048 = vmatprep.subr.mxu0 0.0
        %1049 = vmatpush1.xpose.msra.mxu0 0.0
        %1050 = vmatprep.subr.mxu0 0.0
        %1051 = vmatpush1.xpose.msra.mxu0 0.0
        %1052 = vmatprep.subr.mxu0 0.0
        %1053 = vmatpush1.xpose.msra.mxu0 0.0
        %1054 = vmatprep.subr.mxu0 0.0
        %1055 = vmatpush1.xpose.msra.mxu0 0.0
        %1056 = vmatprep.subr.mxu0 0.0
        %1057 = vmatpush1.xpose.msra.mxu0 0.0
        %1058 = vmatprep.subr.mxu0 0.0
        %1059 = vmatpush1.xpose.msra.mxu0 0.0
        %1060 = vmatprep.subr.mxu0 0.0
        %1061 = vmatpush1.xpose.msra.mxu0 0.0
        %1062 = vmatprep.subr.mxu0 0.0
        %1063 = vmatpush1.xpose.msra.mxu0 0.0
        %1064 = vmatprep.subr.mxu0 0.0
        %1065 = vmatpush1.xpose.msra.mxu0 0.0
        %1066 = vmatprep.subr.mxu0 0.0
        %1067 = vmatpush1.xpose.msra.mxu0 0.0
        %1068 = vmatprep.subr.mxu0 0.0
        %1069 = vmatpush1.xpose.msra.mxu0 0.0
        %1070 = vmatprep.subr.mxu0 0.0
        %1071 = vmatpush1.xpose.msra.mxu0 0.0
        %1072 = vmatprep.subr.mxu0 0.0
        %1073 = vmatpush1.xpose.msra.mxu0 0.0
        %1074 = vmatprep.subr.mxu0 0.0
        %1075 = vmatpush1.xpose.msra.mxu0 0.0
        %1076 = vmatprep.subr.mxu0 0.0
        %1077 = vmatpush1.xpose.msra.mxu0 0.0
        %1078 = vmatprep.subr.mxu0 0.0
        %1079 = vmatpush1.xpose.msra.mxu0 0.0
        %1080 = vmatprep.subr.mxu0 0.0
        %1081 = vmatpush1.xpose.msra.mxu0 0.0
        %1082 = vmatprep.subr.mxu0 0.0
        %1083 = vmatpush1.xpose.msra.mxu0 0.0
        %1084 = vmatprep.subr.mxu0 0.0
        %1085 = vmatpush1.xpose.msra.mxu0 0.0
        %1086 = vmatprep.subr.mxu0 0.0
        %1087 = vmatpush1.xpose.msra.mxu0 0.0
        %1088 = vmatprep.subr.mxu0 0.0
        %1089 = vmatpush1.xpose.msra.mxu0 0.0
        %1090 = vmatprep.subr.mxu0 0.0
        %1091 = vmatpush1.xpose.msra.mxu0 0.0
        %1092 = vmatprep.subr.mxu0 0.0
        %1093 = vmatpush1.xpose.msra.mxu0 0.0
        %1094 = vmatprep.subr.mxu0 0.0
        %1095 = vmatpush1.xpose.msra.mxu0 0.0
        %1096 = vmatprep.subr.mxu0 0.0
        %1097 = vmatpush1.xpose.msra.mxu0 0.0
        %1098 = vmatprep.subr.mxu0 0.0
        %1099 = vmatpush1.xpose.msra.mxu0 0.0
        %1100 = vmatprep.subr.mxu0 0.0
        %1101 = vmatpush1.xpose.msra.mxu0 0.0
        %1102 = vmatprep.subr.mxu0 0.0
        %1103 = vmatpush1.xpose.msra.mxu0 0.0
        %1104 = vmatprep.subr.mxu0 0.0
        %1105 = vmatpush1.xpose.msra.mxu0 0.0
        %1106 = vmatprep.mubr.f32.mxu0 0.0
        %v1107 = vand.u32 %v336, 4294901760
        %v1108 = vsub.f32 %v336, %v1107
        %v1109 = vand.u32 %v1108, 4294901760
        %1110 = vmatmul.mubr.f32.gmra.mrb[0].mxu0 %v1109
        %v1111 = vpop.f32.mrb[0].mxu0
        %v1112 = vadd.f32 %v1037, %v1111
        %v1113 = vpop.f32.mrb[0].mxu0
        %1114 = vdwg.mxu0
        %1115 = vmatprep.subr.mxu0 0.0
        %v1116 = vand.u32 %v802, 4294901760
        %v1117 = vsub.f32 %v802, %v1116
        %v1118 = vand.u32 %v1117, 4294901760
        %1119 = vmatpush1.xpose.msra.mxu0 %v1118
        %1120 = vmatprep.subr.mxu0 0.0
        %v1121 = vand.u32 %v804, 4294901760
        %v1122 = vsub.f32 %v804, %v1121
        %v1123 = vand.u32 %v1122, 4294901760
        %1124 = vmatpush1.xpose.msra.mxu0 %v1123
        %1125 = vmatprep.subr.mxu0 0.0
        %1126 = vmatpush1.xpose.msra.mxu0 0.0
        %1127 = vmatprep.subr.mxu0 0.0
        %1128 = vmatpush1.xpose.msra.mxu0 0.0
        %1129 = vmatprep.subr.mxu0 0.0
        %1130 = vmatpush1.xpose.msra.mxu0 0.0
        %1131 = vmatprep.subr.mxu0 0.0
        %1132 = vmatpush1.xpose.msra.mxu0 0.0
        %1133 = vmatprep.subr.mxu0 0.0
        %1134 = vmatpush1.xpose.msra.mxu0 0.0
        %1135 = vmatprep.subr.mxu0 0.0
        %1136 = vmatpush1.xpose.msra.mxu0 0.0
        %1137 = vmatprep.subr.mxu0 0.0
        %1138 = vmatpush1.xpose.msra.mxu0 0.0
        %1139 = vmatprep.subr.mxu0 0.0
        %1140 = vmatpush1.xpose.msra.mxu0 0.0
        %1141 = vmatprep.subr.mxu0 0.0
        %1142 = vmatpush1.xpose.msra.mxu0 0.0
        %1143 = vmatprep.subr.mxu0 0.0
        %1144 = vmatpush1.xpose.msra.mxu0 0.0
        %1145 = vmatprep.subr.mxu0 0.0
        %1146 = vmatpush1.xpose.msra.mxu0 0.0
        %1147 = vmatprep.subr.mxu0 0.0
        %1148 = vmatpush1.xpose.msra.mxu0 0.0
        %1149 = vmatprep.subr.mxu0 0.0
        %1150 = vmatpush1.xpose.msra.mxu0 0.0
        %1151 = vmatprep.subr.mxu0 0.0
        %1152 = vmatpush1.xpose.msra.mxu0 0.0
        %1153 = vmatprep.subr.mxu0 0.0
        %1154 = vmatpush1.xpose.msra.mxu0 0.0
        %1155 = vmatprep.subr.mxu0 0.0
        %1156 = vmatpush1.xpose.msra.mxu0 0.0
        %1157 = vmatprep.subr.mxu0 0.0
        %1158 = vmatpush1.xpose.msra.mxu0 0.0
        %1159 = vmatprep.subr.mxu0 0.0
        %1160 = vmatpush1.xpose.msra.mxu0 0.0
        %1161 = vmatprep.subr.mxu0 0.0
        %1162 = vmatpush1.xpose.msra.mxu0 0.0
        %1163 = vmatprep.subr.mxu0 0.0
        %1164 = vmatpush1.xpose.msra.mxu0 0.0
        %1165 = vmatprep.subr.mxu0 0.0
        %1166 = vmatpush1.xpose.msra.mxu0 0.0
        %1167 = vmatprep.subr.mxu0 0.0
        %1168 = vmatpush1.xpose.msra.mxu0 0.0
        %1169 = vmatprep.subr.mxu0 0.0
        %1170 = vmatpush1.xpose.msra.mxu0 0.0
        %1171 = vmatprep.subr.mxu0 0.0
        %1172 = vmatpush1.xpose.msra.mxu0 0.0
        %1173 = vmatprep.subr.mxu0 0.0
        %1174 = vmatpush1.xpose.msra.mxu0 0.0
        %1175 = vmatprep.subr.mxu0 0.0
        %1176 = vmatpush1.xpose.msra.mxu0 0.0
        %1177 = vmatprep.subr.mxu0 0.0
        %1178 = vmatpush1.xpose.msra.mxu0 0.0
        %1179 = vmatprep.subr.mxu0 0.0
        %1180 = vmatpush1.xpose.msra.mxu0 0.0
        %1181 = vmatprep.subr.mxu0 0.0
        %1182 = vmatpush1.xpose.msra.mxu0 0.0
        %1183 = vmatprep.subr.mxu0 0.0
        %1184 = vmatpush1.xpose.msra.mxu0 0.0
        %1185 = vmatprep.mubr.f32.mxu0 0.0
        %v1186 = vand.u32 %v336, 4294901760
        %1187 = vmatmul.mubr.f32.gmra.mrb[0].mxu0 %v1186
        %v1188 = vpop.f32.mrb[0].mxu0
        %v1189 = vadd.f32 %v1112, %v1188
        %v1190 = vpop.f32.mrb[0].mxu0
        %1191 = vdwg.mxu0
        %1192 = vmatprep.subr.mxu0 0.0
        %v1193 = vand.u32 %v802, 4294901760
        %1194 = vmatpush1.xpose.msra.mxu0 %v1193
        %1195 = vmatprep.subr.mxu0 0.0
        %v1196 = vand.u32 %v804, 4294901760
        %1197 = vmatpush1.xpose.msra.mxu0 %v1196
        %1198 = vmatprep.subr.mxu0 0.0
        %1199 = vmatpush1.xpose.msra.mxu0 0.0
        %1200 = vmatprep.subr.mxu0 0.0
        %1201 = vmatpush1.xpose.msra.mxu0 0.0
        %1202 = vmatprep.subr.mxu0 0.0
        %1203 = vmatpush1.xpose.msra.mxu0 0.0
        %1204 = vmatprep.subr.mxu0 0.0
        %1205 = vmatpush1.xpose.msra.mxu0 0.0
        %1206 = vmatprep.subr.mxu0 0.0
        %1207 = vmatpush1.xpose.msra.mxu0 0.0
        %1208 = vmatprep.subr.mxu0 0.0
        %1209 = vmatpush1.xpose.msra.mxu0 0.0
        %1210 = vmatprep.subr.mxu0 0.0
        %1211 = vmatpush1.xpose.msra.mxu0 0.0
        %1212 = vmatprep.subr.mxu0 0.0
        %1213 = vmatpush1.xpose.msra.mxu0 0.0
        %1214 = vmatprep.subr.mxu0 0.0
        %1215 = vmatpush1.xpose.msra.mxu0 0.0
        %1216 = vmatprep.subr.mxu0 0.0
        %1217 = vmatpush1.xpose.msra.mxu0 0.0
        %1218 = vmatprep.subr.mxu0 0.0
        %1219 = vmatpush1.xpose.msra.mxu0 0.0
        %1220 = vmatprep.subr.mxu0 0.0
        %1221 = vmatpush1.xpose.msra.mxu0 0.0
        %1222 = vmatprep.subr.mxu0 0.0
        %1223 = vmatpush1.xpose.msra.mxu0 0.0
        %1224 = vmatprep.subr.mxu0 0.0
        %1225 = vmatpush1.xpose.msra.mxu0 0.0
        %1226 = vmatprep.subr.mxu0 0.0
        %1227 = vmatpush1.xpose.msra.mxu0 0.0
        %1228 = vmatprep.subr.mxu0 0.0
        %1229 = vmatpush1.xpose.msra.mxu0 0.0
        %1230 = vmatprep.subr.mxu0 0.0
        %1231 = vmatpush1.xpose.msra.mxu0 0.0
        %1232 = vmatprep.subr.mxu0 0.0
        %1233 = vmatpush1.xpose.msra.mxu0 0.0
        %1234 = vmatprep.subr.mxu0 0.0
        %1235 = vmatpush1.xpose.msra.mxu0 0.0
        %1236 = vmatprep.subr.mxu0 0.0
        %1237 = vmatpush1.xpose.msra.mxu0 0.0
        %1238 = vmatprep.subr.mxu0 0.0
        %1239 = vmatpush1.xpose.msra.mxu0 0.0
        %1240 = vmatprep.subr.mxu0 0.0
        %1241 = vmatpush1.xpose.msra.mxu0 0.0
        %1242 = vmatprep.subr.mxu0 0.0
        %1243 = vmatpush1.xpose.msra.mxu0 0.0
        %1244 = vmatprep.subr.mxu0 0.0
        %1245 = vmatpush1.xpose.msra.mxu0 0.0
        %1246 = vmatprep.subr.mxu0 0.0
        %1247 = vmatpush1.xpose.msra.mxu0 0.0
        %1248 = vmatprep.subr.mxu0 0.0
        %1249 = vmatpush1.xpose.msra.mxu0 0.0
        %1250 = vmatprep.subr.mxu0 0.0
        %1251 = vmatpush1.xpose.msra.mxu0 0.0
        %1252 = vmatprep.subr.mxu0 0.0
        %1253 = vmatpush1.xpose.msra.mxu0 0.0
        %1254 = vmatprep.subr.mxu0 0.0
        %1255 = vmatpush1.xpose.msra.mxu0 0.0
        %1256 = vmatprep.subr.mxu0 0.0
        %1257 = vmatpush1.xpose.msra.mxu0 0.0
        %1258 = vmatprep.mubr.f32.mxu0 0.0
        %v1259 = vand.u32 %v336, 4294901760
        %1260 = vmatmul.mubr.f32.gmra.mrb[0].mxu0 %v1259
        %v1261 = vpop.f32.mrb[0].mxu0
        %v1262 = vadd.f32 %v1189, %v1261
        %v1263 = vpop.f32.mrb[0].mxu0
        %1264 = vdwg.mxu0
        %v1265 = vmul.f32 %v1262, %v327
        %s1266 = scalar_lea.vmem [#allocation3], %s24
        %vm1267 = vcmask 73728
        %1268 = vst.msk [vmem:[%s1266] sm:$0x1] %vm1267, %v1265
        %p1269 = scmp.eq.s32.totalorder %s24, 0
        // Predicated region
        $region49: #{tpu_custom_call.1} parent=43 // pred_check
          %p1270 = pneg %p1269
        $region50: #{tpu_custom_call.1} parent=43 // pred_check_branch
          %1272 = sbr.rel (%p1270) target = $region52
        $region51: #{tpu_custom_call.1} parent=43 // pred_region
          %1273 = vst.msk [vmem:[#allocation2] sm:$0xff] %vm334, %v332
          %vm1274 = vcmask 74752
          %1275 = vst.msk [vmem:[#allocation2 + $0x8] sm:$0x3] %vm1274, %v333
        $region52: #{tpu_custom_call.1} parent=43 // pred_fallthru
          _
        %p1276 = scmp.ne.s32.totalorder %s24, 0
        // Predicated region
        $region53: #{tpu_custom_call.1} parent=43 // pred_check
          %p1277 = pneg %p1276
        $region54: #{tpu_custom_call.1} parent=43 // pred_check_branch
          %1279 = sbr.rel (%p1277) target = $region56
        $region55: #{tpu_custom_call.1} parent=43 // pred_region
          %v1280 = vld [vmem:[#allocation2] sm:$0xff]
          %v1281 = vld [vmem:[#allocation2 + $0x8] sm:$0x3]
          %v1282 = vadd.f32 %v1280, %v332
          %v1283 = vadd.f32 %v1281, %v333
          %1284 = vst.msk [vmem:[#allocation2] sm:$0xff] %vm334, %v1282
          %vm1285 = vcmask 74752
          %1286 = vst.msk [vmem:[#allocation2 + $0x8] sm:$0x3] %vm1285, %v1283
        $region56: #{tpu_custom_call.1} parent=43 // pred_fallthru
          _
        %p1287 = scmp.eq.s32.totalorder %s24, 3
        // Predicated region
        $region57: #{tpu_custom_call.1} parent=43 // pred_check
          %p1288 = pneg %p1287
        $region58: #{tpu_custom_call.1} parent=43 // pred_check_branch
          %1290 = sbr.rel (%p1288) target = $region60
        $region59: #{tpu_custom_call.1} parent=43 // pred_region
          %v1291 = vld [vmem:[%s309] sm:$0xff]
          %v1292 = vld [vmem:[%s309 + $0x8] sm:$0x3]
          %v1293 = vld [vmem:[#allocation2] sm:$0xff]
          %v1294 = vld [vmem:[#allocation2 + $0x8] sm:$0x3]
          %1295 = vxpose.xlu0.b32.start [1/16] %v1293, 128
          %1296 = vxpose.xlu0.b32.cont [2/16] %v1294, 128
          %1297 = vxpose.xlu0.b32.cont [3/16] 0.0, 128
          %1298 = vxpose.xlu0.b32.cont [4/16] 0.0, 128
          %1299 = vxpose.xlu0.b32.cont [5/16] 0.0, 128
          %1300 = vxpose.xlu0.b32.cont [6/16] 0.0, 128
          %1301 = vxpose.xlu0.b32.cont [7/16] 0.0, 128
          %1302 = vxpose.xlu0.b32.cont [8/16] 0.0, 128
          %1303 = vxpose.xlu0.b32.cont [9/16] 0.0, 128
          %1304 = vxpose.xlu0.b32.cont [10/16] 0.0, 128
          %1305 = vxpose.xlu0.b32.cont [11/16] 0.0, 128
          %1306 = vxpose.xlu0.b32.cont [12/16] 0.0, 128
          %1307 = vxpose.xlu0.b32.cont [13/16] 0.0, 128
          %1308 = vxpose.xlu0.b32.cont [14/16] 0.0, 128
          %1309 = vxpose.xlu0.b32.cont [15/16] 0.0, 128
          %1310 = vxpose.xlu0.b32.end [16/16] 0.0, 128
          %v1311 = vpop.trf.xlu0
          %v1312 = vpop.trf.xlu0
          %v1313 = vpop.trf.xlu0
          %v1314 = vpop.trf.xlu0
          %v1315 = vpop.trf.xlu0
          %v1316 = vpop.trf.xlu0
          %v1317 = vpop.trf.xlu0
          %v1318 = vpop.trf.xlu0
          %v1319 = vpop.trf.xlu0
          %v1320 = vpop.trf.xlu0
          %v1321 = vpop.trf.xlu0
          %v1322 = vpop.trf.xlu0
          %v1323 = vpop.trf.xlu0
          %v1324 = vpop.trf.xlu0
          %v1325 = vpop.trf.xlu0
          %v1326 = vpop.trf.xlu0
          %v1327 = vadd.f32 %v1293, %v1311
          %v1328 = vadd.f32 %v1294, %v1312
          %1330 = vset.pattern.permute.xlu0 0
          %1331 = vperm.xlu0 %1330, %v1291
          %v1332 = vpop.permute.xlu0 %1331
          %1335 = vset.pattern.permute.xlu0 0
          %1336 = vperm.xlu0 %1335, %v1292
          %v1337 = vpop.permute.xlu0 %1336
          %v1339 = vmul.f32 %v1327, %v1332
          %v1340 = vmul.f32 %v1328, %v1337
          %v1341 = vlaneseq
          %v1342 = vshrl.u32 %v1341, 7
          %v1343 = vsub.s32 0, %v1342
          %v1344 = vrot.slane %v327, %v1343
          %v1346 = vmul.f32 %v1339, %v1344
          %v1347 = vmul.f32 %v1340, %v1344
          %v1348 = vld [vmem:[#allocation3] sm:$0xf]
          %vm1349 = vcmask 76800
          %v1350 = vsel %vm1349, %v1348, 0.0
          %1351 = vadd.xlane.f32.xlu0 %v1350
          %v1352 = vpop.xlane.xlu0 %1351
          %vm1353 = vcmp.ne.f32.partialorder %v1352, 0.0
          %v1354 = vld [vmem:[%s1] sm:$0xf]
          %v1355 = vrcp.pop %v1352
          %v1356 = vmul.f32 %v1354, %v1355
          %v1357 = vsel %vm1353, %v1356, 0.0
          %1359 = vset.pattern.permute.xlu0 0
          %1360 = vperm.xlu0 %1359, %v1357
          %v1361 = vpop.permute.xlu0 %1360
          %v1363 = vmul.f32 %v1348, %v1361
          %1364 = vxpose.xlu0.b32.start [1/16] %v1348, 128
          %1365 = vxpose.xlu0.b32.cont [2/16] 0.0, 128
          %1366 = vxpose.xlu0.b32.cont [3/16] 0.0, 128
          %1367 = vxpose.xlu0.b32.cont [4/16] 0.0, 128
          %1368 = vxpose.xlu0.b32.cont [5/16] 0.0, 128
          %1369 = vxpose.xlu0.b32.cont [6/16] 0.0, 128
          %1370 = vxpose.xlu0.b32.cont [7/16] 0.0, 128
          %1371 = vxpose.xlu0.b32.cont [8/16] 0.0, 128
          %1372 = vxpose.xlu0.b32.cont [9/16] 0.0, 128
          %1373 = vxpose.xlu0.b32.cont [10/16] 0.0, 128
          %1374 = vxpose.xlu0.b32.cont [11/16] 0.0, 128
          %1375 = vxpose.xlu0.b32.cont [12/16] 0.0, 128
          %1376 = vxpose.xlu0.b32.cont [13/16] 0.0, 128
          %1377 = vxpose.xlu0.b32.cont [14/16] 0.0, 128
          %1378 = vxpose.xlu0.b32.cont [15/16] 0.0, 128
          %1379 = vxpose.xlu0.b32.end [16/16] 0.0, 128
          %v1380 = vpop.trf.xlu0
          %v1381 = vpop.trf.xlu0
          %v1382 = vpop.trf.xlu0
          %v1383 = vpop.trf.xlu0
          %v1384 = vpop.trf.xlu0
          %v1385 = vpop.trf.xlu0
          %v1386 = vpop.trf.xlu0
          %v1387 = vpop.trf.xlu0
          %v1388 = vpop.trf.xlu0
          %v1389 = vpop.trf.xlu0
          %v1390 = vpop.trf.xlu0
          %v1391 = vpop.trf.xlu0
          %v1392 = vpop.trf.xlu0
          %v1393 = vpop.trf.xlu0
          %v1394 = vpop.trf.xlu0
          %v1395 = vpop.trf.xlu0
          %vm1396 = vcmask 31744
          %v1398 = vsel %vm1396, %v1380, 0
          %v1401 = vsel %vm1396, %v1381, 0
          %vm1403 = vcmask 1043456
          %v1405 = vsel %vm1403, %v1363, 0
          %1407 = vmatprep.subr.mxu0 0.0
          %v1408 = vand.u32 %v1405, 4294901760
          %1409 = vmatpush1.msra.mxu0 %v1408
          %1410 = vmatprep.subr.mxu0 0.0
          %1411 = vmatpush1.msra.mxu0 0.0
          %1412 = vmatprep.subr.mxu0 0.0
          %1413 = vmatpush1.msra.mxu0 0.0
          %1414 = vmatprep.subr.mxu0 0.0
          %1415 = vmatpush1.msra.mxu0 0.0
          %1416 = vmatprep.subr.mxu0 0.0
          %1417 = vmatpush1.msra.mxu0 0.0
          %1418 = vmatprep.subr.mxu0 0.0
          %1419 = vmatpush1.msra.mxu0 0.0
          %1420 = vmatprep.subr.mxu0 0.0
          %1421 = vmatpush1.msra.mxu0 0.0
          %1422 = vmatprep.subr.mxu0 0.0
          %1423 = vmatpush1.msra.mxu0 0.0
          %1424 = vmatprep.subr.mxu0 0.0
          %1425 = vmatpush1.msra.mxu0 0.0
          %1426 = vmatprep.subr.mxu0 0.0
          %1427 = vmatpush1.msra.mxu0 0.0
          %1428 = vmatprep.subr.mxu0 0.0
          %1429 = vmatpush1.msra.mxu0 0.0
          %1430 = vmatprep.subr.mxu0 0.0
          %1431 = vmatpush1.msra.mxu0 0.0
          %1432 = vmatprep.subr.mxu0 0.0
          %1433 = vmatpush1.msra.mxu0 0.0
          %1434 = vmatprep.subr.mxu0 0.0
          %1435 = vmatpush1.msra.mxu0 0.0
          %1436 = vmatprep.subr.mxu0 0.0
          %1437 = vmatpush1.msra.mxu0 0.0
          %1438 = vmatprep.subr.mxu0 0.0
          %1439 = vmatpush1.msra.mxu0 0.0
          %1440 = vmatprep.subr.mxu0 0.0
          %1441 = vmatpush1.msra.mxu0 0.0
          %1442 = vmatprep.subr.mxu0 0.0
          %1443 = vmatpush1.msra.mxu0 0.0
          %1444 = vmatprep.subr.mxu0 0.0
          %1445 = vmatpush1.msra.mxu0 0.0
          %1446 = vmatprep.subr.mxu0 0.0
          %1447 = vmatpush1.msra.mxu0 0.0
          %1448 = vmatprep.subr.mxu0 0.0
          %1449 = vmatpush1.msra.mxu0 0.0
          %1450 = vmatprep.subr.mxu0 0.0
          %1451 = vmatpush1.msra.mxu0 0.0
          %1452 = vmatprep.subr.mxu0 0.0
          %1453 = vmatpush1.msra.mxu0 0.0
          %1454 = vmatprep.subr.mxu0 0.0
          %1455 = vmatpush1.msra.mxu0 0.0
          %1456 = vmatprep.subr.mxu0 0.0
          %1457 = vmatpush1.msra.mxu0 0.0
          %1458 = vmatprep.subr.mxu0 0.0
          %1459 = vmatpush1.msra.mxu0 0.0
          %1460 = vmatprep.subr.mxu0 0.0
          %1461 = vmatpush1.msra.mxu0 0.0
          %1462 = vmatprep.subr.mxu0 0.0
          %1463 = vmatpush1.msra.mxu0 0.0
          %1464 = vmatprep.subr.mxu0 0.0
          %1465 = vmatpush1.msra.mxu0 0.0
          %1466 = vmatprep.subr.mxu0 0.0
          %1467 = vmatpush1.msra.mxu0 0.0
          %1468 = vmatprep.subr.mxu0 0.0
          %1469 = vmatpush1.msra.mxu0 0.0
          %1470 = vmatprep.subr.mxu0 0.0
          %1471 = vmatpush1.msra.mxu0 0.0
          %1472 = vmatprep.mubr.f32.mxu0 0.0
          %v1473 = vand.u32 %v1398, 4294901760
          %v1474 = vsub.f32 %v1398, %v1473
          %v1475 = vand.u32 %v1474, 4294901760
          %v1476 = vsub.f32 %v1474, %v1475
          %v1477 = vand.u32 %v1476, 4294901760
          %1478 = vmatmul.mubr.f32.gmra.mrb[0].mxu0 %v1477
          %v1479 = vpop.f32.mrb[0].mxu0
          %v1480 = vadd.f32 0.0, %v1479
          %v1481 = vpop.f32.mrb[0].mxu0
          %1482 = vmatprep.mubr.f32.mxu0 0.0
          %v1483 = vand.u32 %v1401, 4294901760
          %v1484 = vsub.f32 %v1401, %v1483
          %v1485 = vand.u32 %v1484, 4294901760
          %v1486 = vsub.f32 %v1484, %v1485
          %v1487 = vand.u32 %v1486, 4294901760
          %1488 = vmatmul.mubr.f32.gmra.mrb[0].mxu0 %v1487
          %v1489 = vpop.f32.mrb[0].mxu0
          %v1490 = vadd.f32 0.0, %v1489
          %v1491 = vpop.f32.mrb[0].mxu0
          %1492 = vdwg.mxu0
          %1493 = vmatprep.subr.mxu0 0.0
          %v1494 = vand.u32 %v1405, 4294901760
          %v1495 = vsub.f32 %v1405, %v1494
          %v1496 = vand.u32 %v1495, 4294901760
          %v1497 = vsub.f32 %v1495, %v1496
          %v1498 = vand.u32 %v1497, 4294901760
          %1499 = vmatpush1.msra.mxu0 %v1498
          %1500 = vmatprep.subr.mxu0 0.0
          %1501 = vmatpush1.msra.mxu0 0.0
          %1502 = vmatprep.subr.mxu0 0.0
          %1503 = vmatpush1.msra.mxu0 0.0
          %1504 = vmatprep.subr.mxu0 0.0
          %1505 = vmatpush1.msra.mxu0 0.0
          %1506 = vmatprep.subr.mxu0 0.0
          %1507 = vmatpush1.msra.mxu0 0.0
          %1508 = vmatprep.subr.mxu0 0.0
          %1509 = vmatpush1.msra.mxu0 0.0
          %1510 = vmatprep.subr.mxu0 0.0
          %1511 = vmatpush1.msra.mxu0 0.0
          %1512 = vmatprep.subr.mxu0 0.0
          %1513 = vmatpush1.msra.mxu0 0.0
          %1514 = vmatprep.subr.mxu0 0.0
          %1515 = vmatpush1.msra.mxu0 0.0
          %1516 = vmatprep.subr.mxu0 0.0
          %1517 = vmatpush1.msra.mxu0 0.0
          %1518 = vmatprep.subr.mxu0 0.0
          %1519 = vmatpush1.msra.mxu0 0.0
          %1520 = vmatprep.subr.mxu0 0.0
          %1521 = vmatpush1.msra.mxu0 0.0
          %1522 = vmatprep.subr.mxu0 0.0
          %1523 = vmatpush1.msra.mxu0 0.0
          %1524 = vmatprep.subr.mxu0 0.0
          %1525 = vmatpush1.msra.mxu0 0.0
          %1526 = vmatprep.subr.mxu0 0.0
          %1527 = vmatpush1.msra.mxu0 0.0
          %1528 = vmatprep.subr.mxu0 0.0
          %1529 = vmatpush1.msra.mxu0 0.0
          %1530 = vmatprep.subr.mxu0 0.0
          %1531 = vmatpush1.msra.mxu0 0.0
          %1532 = vmatprep.subr.mxu0 0.0
          %1533 = vmatpush1.msra.mxu0 0.0
          %1534 = vmatprep.subr.mxu0 0.0
          %1535 = vmatpush1.msra.mxu0 0.0
          %1536 = vmatprep.subr.mxu0 0.0
          %1537 = vmatpush1.msra.mxu0 0.0
          %1538 = vmatprep.subr.mxu0 0.0
          %1539 = vmatpush1.msra.mxu0 0.0
          %1540 = vmatprep.subr.mxu0 0.0
          %1541 = vmatpush1.msra.mxu0 0.0
          %1542 = vmatprep.subr.mxu0 0.0
          %1543 = vmatpush1.msra.mxu0 0.0
          %1544 = vmatprep.subr.mxu0 0.0
          %1545 = vmatpush1.msra.mxu0 0.0
          %1546 = vmatprep.subr.mxu0 0.0
          %1547 = vmatpush1.msra.mxu0 0.0
          %1548 = vmatprep.subr.mxu0 0.0
          %1549 = vmatpush1.msra.mxu0 0.0
          %1550 = vmatprep.subr.mxu0 0.0
          %1551 = vmatpush1.msra.mxu0 0.0
          %1552 = vmatprep.subr.mxu0 0.0
          %1553 = vmatpush1.msra.mxu0 0.0
          %1554 = vmatprep.subr.mxu0 0.0
          %1555 = vmatpush1.msra.mxu0 0.0
          %1556 = vmatprep.subr.mxu0 0.0
          %1557 = vmatpush1.msra.mxu0 0.0
          %1558 = vmatprep.subr.mxu0 0.0
          %1559 = vmatpush1.msra.mxu0 0.0
          %1560 = vmatprep.subr.mxu0 0.0
          %1561 = vmatpush1.msra.mxu0 0.0
          %1562 = vmatprep.mubr.f32.mxu0 0.0
          %v1563 = vand.u32 %v1398, 4294901760
          %1564 = vmatmul.mubr.f32.gmra.mrb[0].mxu0 %v1563
          %v1565 = vpop.f32.mrb[0].mxu0
          %v1566 = vadd.f32 %v1480, %v1565
          %v1567 = vpop.f32.mrb[0].mxu0
          %1568 = vmatprep.mubr.f32.mxu0 0.0
          %v1569 = vand.u32 %v1401, 4294901760
          %1570 = vmatmul.mubr.f32.gmra.mrb[0].mxu0 %v1569
          %v1571 = vpop.f32.mrb[0].mxu0
          %v1572 = vadd.f32 %v1490, %v1571
          %v1573 = vpop.f32.mrb[0].mxu0
          %1574 = vdwg.mxu0
          %1575 = vmatprep.subr.mxu0 0.0
          %v1576 = vand.u32 %v1405, 4294901760
          %v1577 = vsub.f32 %v1405, %v1576
          %1578 = vmatpush1.msra.mxu0 %v1577
          %1579 = vmatprep.subr.mxu0 0.0
          %1580 = vmatpush1.msra.mxu0 0.0
          %1581 = vmatprep.subr.mxu0 0.0
          %1582 = vmatpush1.msra.mxu0 0.0
          %1583 = vmatprep.subr.mxu0 0.0
          %1584 = vmatpush1.msra.mxu0 0.0
          %1585 = vmatprep.subr.mxu0 0.0
          %1586 = vmatpush1.msra.mxu0 0.0
          %1587 = vmatprep.subr.mxu0 0.0
          %1588 = vmatpush1.msra.mxu0 0.0
          %1589 = vmatprep.subr.mxu0 0.0
          %1590 = vmatpush1.msra.mxu0 0.0
          %1591 = vmatprep.subr.mxu0 0.0
          %1592 = vmatpush1.msra.mxu0 0.0
          %1593 = vmatprep.subr.mxu0 0.0
          %1594 = vmatpush1.msra.mxu0 0.0
          %1595 = vmatprep.subr.mxu0 0.0
          %1596 = vmatpush1.msra.mxu0 0.0
          %1597 = vmatprep.subr.mxu0 0.0
          %1598 = vmatpush1.msra.mxu0 0.0
          %1599 = vmatprep.subr.mxu0 0.0
          %1600 = vmatpush1.msra.mxu0 0.0
          %1601 = vmatprep.subr.mxu0 0.0
          %1602 = vmatpush1.msra.mxu0 0.0
          %1603 = vmatprep.subr.mxu0 0.0
          %1604 = vmatpush1.msra.mxu0 0.0
          %1605 = vmatprep.subr.mxu0 0.0
          %1606 = vmatpush1.msra.mxu0 0.0
          %1607 = vmatprep.subr.mxu0 0.0
          %1608 = vmatpush1.msra.mxu0 0.0
          %1609 = vmatprep.subr.mxu0 0.0
          %1610 = vmatpush1.msra.mxu0 0.0
          %1611 = vmatprep.subr.mxu0 0.0
          %1612 = vmatpush1.msra.mxu0 0.0
          %1613 = vmatprep.subr.mxu0 0.0
          %1614 = vmatpush1.msra.mxu0 0.0
          %1615 = vmatprep.subr.mxu0 0.0
          %1616 = vmatpush1.msra.mxu0 0.0
          %1617 = vmatprep.subr.mxu0 0.0
          %1618 = vmatpush1.msra.mxu0 0.0
          %1619 = vmatprep.subr.mxu0 0.0
          %1620 = vmatpush1.msra.mxu0 0.0
          %1621 = vmatprep.subr.mxu0 0.0
          %1622 = vmatpush1.msra.mxu0 0.0
          %1623 = vmatprep.subr.mxu0 0.0
          %1624 = vmatpush1.msra.mxu0 0.0
          %1625 = vmatprep.subr.mxu0 0.0
          %1626 = vmatpush1.msra.mxu0 0.0
          %1627 = vmatprep.subr.mxu0 0.0
          %1628 = vmatpush1.msra.mxu0 0.0
          %1629 = vmatprep.subr.mxu0 0.0
          %1630 = vmatpush1.msra.mxu0 0.0
          %1631 = vmatprep.subr.mxu0 0.0
          %1632 = vmatpush1.msra.mxu0 0.0
          %1633 = vmatprep.subr.mxu0 0.0
          %1634 = vmatpush1.msra.mxu0 0.0
          %1635 = vmatprep.subr.mxu0 0.0
          %1636 = vmatpush1.msra.mxu0 0.0
          %1637 = vmatprep.subr.mxu0 0.0
          %1638 = vmatpush1.msra.mxu0 0.0
          %1639 = vmatprep.subr.mxu0 0.0
          %1640 = vmatpush1.msra.mxu0 0.0
          %1641 = vmatprep.mubr.f32.mxu0 0.0
          %v1642 = vand.u32 %v1398, 4294901760
          %v1643 = vsub.f32 %v1398, %v1642
          %1644 = vmatmul.mubr.f32.gmra.mrb[0].mxu0 %v1643
          %v1645 = vpop.f32.mrb[0].mxu0
          %v1646 = vadd.f32 %v1566, %v1645
          %v1647 = vpop.f32.mrb[0].mxu0
          %1648 = vmatprep.mubr.f32.mxu0 0.0
          %v1649 = vand.u32 %v1401, 4294901760
          %v1650 = vsub.f32 %v1401, %v1649
          %1651 = vmatmul.mubr.f32.gmra.mrb[0].mxu0 %v1650
          %v1652 = vpop.f32.mrb[0].mxu0
          %v1653 = vadd.f32 %v1572, %v1652
          %v1654 = vpop.f32.mrb[0].mxu0
          %1655 = vdwg.mxu0
          %1656 = vmatprep.subr.mxu0 0.0
          %v1657 = vand.u32 %v1405, 4294901760
          %1658 = vmatpush1.msra.mxu0 %v1657
          %1659 = vmatprep.subr.mxu0 0.0
          %1660 = vmatpush1.msra.mxu0 0.0
          %1661 = vmatprep.subr.mxu0 0.0
          %1662 = vmatpush1.msra.mxu0 0.0
          %1663 = vmatprep.subr.mxu0 0.0
          %1664 = vmatpush1.msra.mxu0 0.0
          %1665 = vmatprep.subr.mxu0 0.0
          %1666 = vmatpush1.msra.mxu0 0.0
          %1667 = vmatprep.subr.mxu0 0.0
          %1668 = vmatpush1.msra.mxu0 0.0
          %1669 = vmatprep.subr.mxu0 0.0
          %1670 = vmatpush1.msra.mxu0 0.0
          %1671 = vmatprep.subr.mxu0 0.0
          %1672 = vmatpush1.msra.mxu0 0.0
          %1673 = vmatprep.subr.mxu0 0.0
          %1674 = vmatpush1.msra.mxu0 0.0
          %1675 = vmatprep.subr.mxu0 0.0
          %1676 = vmatpush1.msra.mxu0 0.0
          %1677 = vmatprep.subr.mxu0 0.0
          %1678 = vmatpush1.msra.mxu0 0.0
          %1679 = vmatprep.subr.mxu0 0.0
          %1680 = vmatpush1.msra.mxu0 0.0
          %1681 = vmatprep.subr.mxu0 0.0
          %1682 = vmatpush1.msra.mxu0 0.0
          %1683 = vmatprep.subr.mxu0 0.0
          %1684 = vmatpush1.msra.mxu0 0.0
          %1685 = vmatprep.subr.mxu0 0.0
          %1686 = vmatpush1.msra.mxu0 0.0
          %1687 = vmatprep.subr.mxu0 0.0
          %1688 = vmatpush1.msra.mxu0 0.0
          %1689 = vmatprep.subr.mxu0 0.0
          %1690 = vmatpush1.msra.mxu0 0.0
          %1691 = vmatprep.subr.mxu0 0.0
          %1692 = vmatpush1.msra.mxu0 0.0
          %1693 = vmatprep.subr.mxu0 0.0
          %1694 = vmatpush1.msra.mxu0 0.0
          %1695 = vmatprep.subr.mxu0 0.0
          %1696 = vmatpush1.msra.mxu0 0.0
          %1697 = vmatprep.subr.mxu0 0.0
          %1698 = vmatpush1.msra.mxu0 0.0
          %1699 = vmatprep.subr.mxu0 0.0
          %1700 = vmatpush1.msra.mxu0 0.0
          %1701 = vmatprep.subr.mxu0 0.0
          %1702 = vmatpush1.msra.mxu0 0.0
          %1703 = vmatprep.subr.mxu0 0.0
          %1704 = vmatpush1.msra.mxu0 0.0
          %1705 = vmatprep.subr.mxu0 0.0
          %1706 = vmatpush1.msra.mxu0 0.0
          %1707 = vmatprep.subr.mxu0 0.0
          %1708 = vmatpush1.msra.mxu0 0.0
          %1709 = vmatprep.subr.mxu0 0.0
          %1710 = vmatpush1.msra.mxu0 0.0
          %1711 = vmatprep.subr.mxu0 0.0
          %1712 = vmatpush1.msra.mxu0 0.0
          %1713 = vmatprep.subr.mxu0 0.0
          %1714 = vmatpush1.msra.mxu0 0.0
          %1715 = vmatprep.subr.mxu0 0.0
          %1716 = vmatpush1.msra.mxu0 0.0
          %1717 = vmatprep.subr.mxu0 0.0
          %1718 = vmatpush1.msra.mxu0 0.0
          %1719 = vmatprep.subr.mxu0 0.0
          %1720 = vmatpush1.msra.mxu0 0.0
          %1721 = vmatprep.mubr.f32.mxu0 0.0
          %v1722 = vand.u32 %v1398, 4294901760
          %v1723 = vsub.f32 %v1398, %v1722
          %v1724 = vand.u32 %v1723, 4294901760
          %1725 = vmatmul.mubr.f32.gmra.mrb[0].mxu0 %v1724
          %v1726 = vpop.f32.mrb[0].mxu0
          %v1727 = vadd.f32 %v1646, %v1726
          %v1728 = vpop.f32.mrb[0].mxu0
          %1729 = vmatprep.mubr.f32.mxu0 0.0
          %v1730 = vand.u32 %v1401, 4294901760
          %v1731 = vsub.f32 %v1401, %v1730
          %v1732 = vand.u32 %v1731, 4294901760
          %1733 = vmatmul.mubr.f32.gmra.mrb[0].mxu0 %v1732
          %v1734 = vpop.f32.mrb[0].mxu0
          %v1735 = vadd.f32 %v1653, %v1734
          %v1736 = vpop.f32.mrb[0].mxu0
          %1737 = vdwg.mxu0
          %1738 = vmatprep.subr.mxu0 0.0
          %v1739 = vand.u32 %v1405, 4294901760
          %v1740 = vsub.f32 %v1405, %v1739
          %v1741 = vand.u32 %v1740, 4294901760
          %1742 = vmatpush1.msra.mxu0 %v1741
          %1743 = vmatprep.subr.mxu0 0.0
          %1744 = vmatpush1.msra.mxu0 0.0
          %1745 = vmatprep.subr.mxu0 0.0
          %1746 = vmatpush1.msra.mxu0 0.0
          %1747 = vmatprep.subr.mxu0 0.0
          %1748 = vmatpush1.msra.mxu0 0.0
          %1749 = vmatprep.subr.mxu0 0.0
          %1750 = vmatpush1.msra.mxu0 0.0
          %1751 = vmatprep.subr.mxu0 0.0
          %1752 = vmatpush1.msra.mxu0 0.0
          %1753 = vmatprep.subr.mxu0 0.0
          %1754 = vmatpush1.msra.mxu0 0.0
          %1755 = vmatprep.subr.mxu0 0.0
          %1756 = vmatpush1.msra.mxu0 0.0
          %1757 = vmatprep.subr.mxu0 0.0
          %1758 = vmatpush1.msra.mxu0 0.0
          %1759 = vmatprep.subr.mxu0 0.0
          %1760 = vmatpush1.msra.mxu0 0.0
          %1761 = vmatprep.subr.mxu0 0.0
          %1762 = vmatpush1.msra.mxu0 0.0
          %1763 = vmatprep.subr.mxu0 0.0
          %1764 = vmatpush1.msra.mxu0 0.0
          %1765 = vmatprep.subr.mxu0 0.0
          %1766 = vmatpush1.msra.mxu0 0.0
          %1767 = vmatprep.subr.mxu0 0.0
          %1768 = vmatpush1.msra.mxu0 0.0
          %1769 = vmatprep.subr.mxu0 0.0
          %1770 = vmatpush1.msra.mxu0 0.0
          %1771 = vmatprep.subr.mxu0 0.0
          %1772 = vmatpush1.msra.mxu0 0.0
          %1773 = vmatprep.subr.mxu0 0.0
          %1774 = vmatpush1.msra.mxu0 0.0
          %1775 = vmatprep.subr.mxu0 0.0
          %1776 = vmatpush1.msra.mxu0 0.0
          %1777 = vmatprep.subr.mxu0 0.0
          %1778 = vmatpush1.msra.mxu0 0.0
          %1779 = vmatprep.subr.mxu0 0.0
          %1780 = vmatpush1.msra.mxu0 0.0
          %1781 = vmatprep.subr.mxu0 0.0
          %1782 = vmatpush1.msra.mxu0 0.0
          %1783 = vmatprep.subr.mxu0 0.0
          %1784 = vmatpush1.msra.mxu0 0.0
          %1785 = vmatprep.subr.mxu0 0.0
          %1786 = vmatpush1.msra.mxu0 0.0
          %1787 = vmatprep.subr.mxu0 0.0
          %1788 = vmatpush1.msra.mxu0 0.0
          %1789 = vmatprep.subr.mxu0 0.0
          %1790 = vmatpush1.msra.mxu0 0.0
          %1791 = vmatprep.subr.mxu0 0.0
          %1792 = vmatpush1.msra.mxu0 0.0
          %1793 = vmatprep.subr.mxu0 0.0
          %1794 = vmatpush1.msra.mxu0 0.0
          %1795 = vmatprep.subr.mxu0 0.0
          %1796 = vmatpush1.msra.mxu0 0.0
          %1797 = vmatprep.subr.mxu0 0.0
          %1798 = vmatpush1.msra.mxu0 0.0
          %1799 = vmatprep.subr.mxu0 0.0
          %1800 = vmatpush1.msra.mxu0 0.0
          %1801 = vmatprep.subr.mxu0 0.0
          %1802 = vmatpush1.msra.mxu0 0.0
          %1803 = vmatprep.subr.mxu0 0.0
          %1804 = vmatpush1.msra.mxu0 0.0
          %1805 = vmatprep.mubr.f32.mxu0 0.0
          %v1806 = vand.u32 %v1398, 4294901760
          %1807 = vmatmul.mubr.f32.gmra.mrb[0].mxu0 %v1806
          %v1808 = vpop.f32.mrb[0].mxu0
          %v1809 = vadd.f32 %v1727, %v1808
          %v1810 = vpop.f32.mrb[0].mxu0
          %1811 = vmatprep.mubr.f32.mxu0 0.0
          %v1812 = vand.u32 %v1401, 4294901760
          %1813 = vmatmul.mubr.f32.gmra.mrb[0].mxu0 %v1812
          %v1814 = vpop.f32.mrb[0].mxu0
          %v1815 = vadd.f32 %v1735, %v1814
          %v1816 = vpop.f32.mrb[0].mxu0
          %1817 = vdwg.mxu0
          %1818 = vmatprep.subr.mxu0 0.0
          %v1819 = vand.u32 %v1405, 4294901760
          %1820 = vmatpush1.msra.mxu0 %v1819
          %1821 = vmatprep.subr.mxu0 0.0
          %1822 = vmatpush1.msra.mxu0 0.0
          %1823 = vmatprep.subr.mxu0 0.0
          %1824 = vmatpush1.msra.mxu0 0.0
          %1825 = vmatprep.subr.mxu0 0.0
          %1826 = vmatpush1.msra.mxu0 0.0
          %1827 = vmatprep.subr.mxu0 0.0
          %1828 = vmatpush1.msra.mxu0 0.0
          %1829 = vmatprep.subr.mxu0 0.0
          %1830 = vmatpush1.msra.mxu0 0.0
          %1831 = vmatprep.subr.mxu0 0.0
          %1832 = vmatpush1.msra.mxu0 0.0
          %1833 = vmatprep.subr.mxu0 0.0
          %1834 = vmatpush1.msra.mxu0 0.0
          %1835 = vmatprep.subr.mxu0 0.0
          %1836 = vmatpush1.msra.mxu0 0.0
          %1837 = vmatprep.subr.mxu0 0.0
          %1838 = vmatpush1.msra.mxu0 0.0
          %1839 = vmatprep.subr.mxu0 0.0
          %1840 = vmatpush1.msra.mxu0 0.0
          %1841 = vmatprep.subr.mxu0 0.0
          %1842 = vmatpush1.msra.mxu0 0.0
          %1843 = vmatprep.subr.mxu0 0.0
          %1844 = vmatpush1.msra.mxu0 0.0
          %1845 = vmatprep.subr.mxu0 0.0
          %1846 = vmatpush1.msra.mxu0 0.0
          %1847 = vmatprep.subr.mxu0 0.0
          %1848 = vmatpush1.msra.mxu0 0.0
          %1849 = vmatprep.subr.mxu0 0.0
          %1850 = vmatpush1.msra.mxu0 0.0
          %1851 = vmatprep.subr.mxu0 0.0
          %1852 = vmatpush1.msra.mxu0 0.0
          %1853 = vmatprep.subr.mxu0 0.0
          %1854 = vmatpush1.msra.mxu0 0.0
          %1855 = vmatprep.subr.mxu0 0.0
          %1856 = vmatpush1.msra.mxu0 0.0
          %1857 = vmatprep.subr.mxu0 0.0
          %1858 = vmatpush1.msra.mxu0 0.0
          %1859 = vmatprep.subr.mxu0 0.0
          %1860 = vmatpush1.msra.mxu0 0.0
          %1861 = vmatprep.subr.mxu0 0.0
          %1862 = vmatpush1.msra.mxu0 0.0
          %1863 = vmatprep.subr.mxu0 0.0
          %1864 = vmatpush1.msra.mxu0 0.0
          %1865 = vmatprep.subr.mxu0 0.0
          %1866 = vmatpush1.msra.mxu0 0.0
          %1867 = vmatprep.subr.mxu0 0.0
          %1868 = vmatpush1.msra.mxu0 0.0
          %1869 = vmatprep.subr.mxu0 0.0
          %1870 = vmatpush1.msra.mxu0 0.0
          %1871 = vmatprep.subr.mxu0 0.0
          %1872 = vmatpush1.msra.mxu0 0.0
          %1873 = vmatprep.subr.mxu0 0.0
          %1874 = vmatpush1.msra.mxu0 0.0
          %1875 = vmatprep.subr.mxu0 0.0
          %1876 = vmatpush1.msra.mxu0 0.0
          %1877 = vmatprep.subr.mxu0 0.0
          %1878 = vmatpush1.msra.mxu0 0.0
          %1879 = vmatprep.subr.mxu0 0.0
          %1880 = vmatpush1.msra.mxu0 0.0
          %1881 = vmatprep.subr.mxu0 0.0
          %1882 = vmatpush1.msra.mxu0 0.0
          %1883 = vmatprep.mubr.f32.mxu0 0.0
          %v1884 = vand.u32 %v1398, 4294901760
          %1885 = vmatmul.mubr.f32.gmra.mrb[0].mxu0 %v1884
          %v1886 = vpop.f32.mrb[0].mxu0
          %v1887 = vadd.f32 %v1809, %v1886
          %v1888 = vpop.f32.mrb[0].mxu0
          %1889 = vmatprep.mubr.f32.mxu0 0.0
          %v1890 = vand.u32 %v1401, 4294901760
          %1891 = vmatmul.mubr.f32.gmra.mrb[0].mxu0 %v1890
          %v1892 = vpop.f32.mrb[0].mxu0
          %v1893 = vadd.f32 %v1815, %v1892
          %v1894 = vpop.f32.mrb[0].mxu0
          %1895 = vdwg.mxu0
          %v1896 = vsub.f32 %v1346, %v1887
          %v1897 = vsub.f32 %v1347, %v1893
          %s1898 = sld [smem:[#allocation4]]
          %v1899 = vstv %s1898
          %v1900 = vadd.f32 %v1896, %v1899
          %v1901 = vadd.f32 %v1897, %v1899
          %v1902 = vxor.u32 %v1900, 2147483648
          %v1903 = vxor.u32 %v1901, 2147483648
          %v1904 = vmul.f32 %v1902, 1.442695
          %v1905 = vpow.pop %v1904
          %v1906 = vmul.f32 %v1903, 1.442695
          %v1907 = vpow.pop %v1906
          %v1908 = vadd.f32 %v1905, 1.0
          %v1909 = vadd.f32 %v1907, 1.0
          %v1910 = vrcp.pop %v1908
          %v1911 = vmul.f32 1.0, %v1910
          %v1912 = vrcp.pop %v1909
          %v1913 = vmul.f32 1.0, %v1912
          %1914 = vst.msk [vmem:[%s326] sm:$0xff] %vm334, %v1911
          %vm1915 = vcmask 74752
          %1916 = vst.msk [vmem:[%s326 + $0x8] sm:$0x3] %vm1915, %v1913
        $region60: #{tpu_custom_call.1} parent=43 // pred_fallthru
          _
        %p1917 = scmp.lt.s32.totalorder %s23, 1
        %s1918 = scalar_select %p1917, %s23, 1
        %s1919 = smul.addr %s1918, 2
        %s1920 = smul.addr %s1919, 8
        %s1921 = scalar_lea.vmem %s6, %s1920
        // Predicated region
        $region61: #{tpu_custom_call.1} parent=43 // pred_check
          %p1922 = pneg %p192
        $region62: #{tpu_custom_call.1} parent=43 // pred_check_branch
          %1924 = sbr.rel (%p1922) target = $region64
        $region63: #{tpu_custom_call.1} parent=43 // pred_region
          _
        $region64: #{tpu_custom_call.1} parent=43 // pred_fallthru
          _
      $region44: #{tpu_custom_call.1} parent=5 // pred_fallthru
        _
      %p1925 = scmp.le.s32.totalorder 2, %s14
      // Predicated region
      $region65: #{tpu_custom_call.1} parent=5 // pred_check
        %p1926 = pneg %p1925
      $region66: #{tpu_custom_call.1} parent=5 // pred_check_branch
        %1928 = sbr.rel (%p1926) target = $region68
      $region67: #{tpu_custom_call.1} parent=5 // pred_region
        %s1929 = ssub.s32 %s14, 2
        // Predicated region
        $region69: #{tpu_custom_call.1} parent=67 // pred_check
          %p1930 = pneg %p198
        $region70: #{tpu_custom_call.1} parent=67 // pred_check_branch
          %1932 = sbr.rel (%p1930) target = $region72
        $region71: #{tpu_custom_call.1} parent=67 // pred_region
          %p1933 = scmp.lt.s32.totalorder %s25, 1
          %s1934 = scalar_select %p1933, %s25, 1
          %s1935 = smul.addr %s1934, 2
          %s1936 = smul.addr %s1935, 8
          %s1937 = scalar_lea.vmem %s6, %s1936
        $region72: #{tpu_custom_call.1} parent=67 // pred_fallthru
          _
      $region68: #{tpu_custom_call.1} parent=5 // pred_fallthru
        _
    $region6: #{tpu_custom_call.1} parent=1 // loop_footer
      %s18 = sadd.s32 1, %s14
    $region7: #{tpu_custom_call.1} parent=1 // loop_footer_branch
      %13 = sbr.rel target = $region3
    $region8: #{tpu_custom_call.1} parent=1 // loop_exit
      _
    %1938 = vsyncpa [#allocation6], 1
    %s1939 = scalar_lea.sflag [#allocation6], 1
    %1940 = vsyncpa %s1939, 1

</llo_original>
